<compile_context>
chip_gen: v5e
topology: v5e:2x2
jax: 0.10.0
libtpu: 0.0.40
codegen_flags: <defaults>
</compile_context>

<pallas_src>
import math

import jax
import jax.numpy as jnp
from jax.experimental import pallas as pl
from jax.experimental.pallas import tpu as pltpu


# ---------------------------------------------------------------------------
# helpers
# ---------------------------------------------------------------------------
def _pick_tile(n, candidates):
    """Largest candidate that divides n; fall back to n (full-extent block)."""
    for t in candidates:
        if t <= n and n % t == 0:
            return t
    return n


def _vmem_budget():
    """~96 MiB on v5e/v6e (128 MiB physical), ~48 MiB on v7x (64 MiB)."""
    try:
        phys = pltpu.get_tpu_info().vmem_capacity_bytes
    except Exception:
        return 48 * 1024 * 1024
    return int(min(96 * 1024 * 1024, max(32 * 1024 * 1024, phys * 3 // 4)))


def _resident_spec(shape, single_buffer):
    """BlockSpec for a grid-invariant operand (always block 0)."""
    nd = len(shape)
    index_map = lambda *_: (0,) * nd
    if single_buffer:
        # index_map is grid-invariant -> double-buffering is pure VMEM waste
        return pl.BlockSpec(shape, index_map, pipeline_mode=pl.Buffered(1))
    return pl.BlockSpec(shape, index_map)


# ---------------------------------------------------------------------------
# Kernel 1: fused q/k/v projection (query/key/value Linear + MHA in_proj,
# pre-fused in the wrapper).  Grid = (batch, seq-block).  Writes head-major
# (nh, TM, dh) blocks directly, so no wrapper transpose round trip.
# ---------------------------------------------------------------------------
def _qkv_proj_kernel(x_ref, wq_ref, bq_ref, wk_ref, bk_ref, wv_ref, bv_ref,
                     q_ref, k_ref, v_ref):
    nh, _, dh = q_ref.shape
    x = x_ref[...]                                      # (TM, H) bf16

    def proj(w_ref, b_ref):
        y = jnp.dot(x, w_ref[...],
                    preferred_element_type=jnp.float32) + b_ref[...]
        return y.astype(jnp.bfloat16)                   # bf16 operands, f32 acc

    q = proj(wq_ref, bq_ref)   # 1/sqrt(dh) already folded into wq/bq
    k = proj(wk_ref, bk_ref)
    v = proj(wv_ref, bv_ref)

    # head-major writeback (static unrolled loop over heads)
    for h in range(nh):
        sl = slice(h * dh, (h + 1) * dh)
        q_ref[h] = q[:, sl]
        k_ref[h] = k[:, sl]
        v_ref[h] = v[:, sl]


# ---------------------------------------------------------------------------
# Kernel 2: multi-head attention core + out_proj.
# Grid = (batch, query-block); heads are a batched einsum axis.
# ---------------------------------------------------------------------------
def _attn_kernel(q_ref, k_ref, v_ref, bias_ref, wo_ref, bo_ref, o_ref):
    nh = q_ref.shape[0]
    q = q_ref[...]            # (nh, TQ, dh) bf16, pre-scaled by 1/sqrt(dh)
    k = k_ref[...]            # (nh, S,  dh) bf16
    v = v_ref[...]            # (nh, S,  dh) bf16

    # scores with f32 accumulation on the MXU
    # TODO(synk): feed K pre-transposed as (nh, dh, S) to avoid the rhs
    #             last-dim contraction layout if it shows up in profiles.
    s = jnp.einsum('hqd,hkd->hqk', q, k,
                   preferred_element_type=jnp.float32)          # (nh, TQ, S)
    s = s + bias_ref[...]                                       # (1, S) key mask

    # numerically-stable softmax with DEFERRED normalization:
    # PV runs on unnormalized exp(s - m); ctx scaled by 1/denom afterwards.
    m = jnp.max(s, axis=-1, keepdims=True)
    e = jnp.exp(s - m)
    denom = jnp.sum(e, axis=-1, keepdims=True)
    ctx = jnp.einsum('hqk,hkd->hqd', e.astype(jnp.bfloat16), v,
                     preferred_element_type=jnp.float32)        # (nh, TQ, dh)
    ctx = (ctx * pl.reciprocal(denom, approx=True)).astype(jnp.bfloat16)

    # concat heads along lanes -> (TQ, H); single K=H out_proj matmul
    ctx2d = jnp.concatenate([ctx[h] for h in range(nh)], axis=-1)
    out = jnp.dot(ctx2d, wo_ref[...],
                  preferred_element_type=jnp.float32) + bo_ref[...]
    o_ref[...] = out.astype(o_ref.dtype)


# ---------------------------------------------------------------------------
# Wrapper
# ---------------------------------------------------------------------------
def bert_attention_forward(params, hidden_states, attention_mask,
                           num_attention_heads):
    B, S, H = hidden_states.shape
    nh = num_attention_heads
    assert H % nh == 0
    dh = H // nh
    scale = 1.0 / math.sqrt(dh)
    f32 = jnp.float32

    # ---- offline fusion of the two chained Linears per stream --------------
    def fuse(w1, b1, w2, b2, s=1.0):
        w = (w1.astype(f32) @ w2.astype(f32)) * s
        b = (b1.astype(f32) @ w2.astype(f32) + b2.astype(f32)) * s
        return w.astype(jnp.bfloat16), b.reshape(1, -1).astype(f32)

    wq, bq = fuse(params['wq1'], params['bq1'],
                  params['wq2'], params['bq2'], scale)   # fold 1/sqrt(dh) into q
    wk, bk = fuse(params['wk1'], params['bk1'], params['wk2'], params['bk2'])
    wv, bv = fuse(params['wv1'], params['bv1'], params['wv2'], params['bv2'])
    wo = params['wo'].astype(jnp.bfloat16)
    bo = params['bo'].reshape(1, -1).astype(f32)

    x = hidden_states.astype(jnp.bfloat16)
    vmem = _vmem_budget()

    # ---- kernel 1: fused projection, head-major outputs --------------------
    TM = _pick_tile(S, (512, 384, 256, 128, 64, 32, 16, 8))
    grid1 = (B, S // TM)

    def run_qkv(single_buffer):
        w_spec = _resident_spec((H, H), single_buffer)
        b_spec = _resident_spec((1, H), single_buffer)
        head_out = pl.BlockSpec((None, nh, TM, dh), lambda b, si: (b, 0, si, 0))
        return pl.pallas_call(
            _qkv_proj_kernel,
            grid=grid1,
            in_specs=[pl.BlockSpec((None, TM, H), lambda b, si: (b, si, 0)),
                      w_spec, b_spec, w_spec, b_spec, w_spec, b_spec],
            out_specs=(head_out, head_out, head_out),
            out_shape=tuple(jax.ShapeDtypeStruct((B, nh, S, dh), jnp.bfloat16)
                            for _ in range(3)),
            compiler_params=pltpu.CompilerParams(
                dimension_semantics=("parallel", "parallel"),
                vmem_limit_bytes=vmem),
        )(x, wq, bq, wk, bk, wv, bv)

    try:
        qh, kh, vh = run_qkv(single_buffer=True)
    except Exception:          # pl.Buffered(1) unsupported -> default buffering
        qh, kh, vh = run_qkv(single_buffer=False)

    # ---- additive key-mask bias (hoisted broadcast) -------------------------
    # torch bool attn_mask semantics: nonzero == key is BLOCKED.
    if attention_mask is not None:
        bias = jnp.where(attention_mask != 0, -1e9, 0.0).astype(f32)
    else:
        bias = jnp.zeros((B, S), f32)
    bias = bias.reshape(B, 1, S)

    # ---- kernel 2: attention + out_proj -------------------------------------
    TQ = _pick_tile(S, (256, 128, 64, 32, 16, 8))
    if B == 1 and S // TQ < 2 and S >= 16:
        # v7x has 2 TensorCores: make sure the grid has >= 2 points
        TQ = _pick_tile(S, tuple(t for t in (256, 128, 64, 32, 16, 8)
                                 if t <= S // 2))
    grid2 = (B, S // TQ)

    def run_attn(single_buffer):
        wo_spec = _resident_spec((H, H), single_buffer)
        bo_spec = _resident_spec((1, H), single_buffer)
        return pl.pallas_call(
            _attn_kernel,
            grid=grid2,
            in_specs=[
                pl.BlockSpec((None, nh, TQ, dh), lambda b, qi: (b, 0, qi, 0)),
                pl.BlockSpec((None, nh, S, dh), lambda b, qi: (b, 0, 0, 0)),
                pl.BlockSpec((None, nh, S, dh), lambda b, qi: (b, 0, 0, 0)),
                pl.BlockSpec((None, 1, S), lambda b, qi: (b, 0, 0)),
                wo_spec, bo_spec,
            ],
            out_specs=pl.BlockSpec((None, TQ, H), lambda b, qi: (b, qi, 0)),
            out_shape=jax.ShapeDtypeStruct((B, S, H), jnp.bfloat16),
            compiler_params=pltpu.CompilerParams(
                dimension_semantics=("parallel", "parallel"),
                vmem_limit_bytes=vmem),
        )(qh, kh, vh, bias, wo, bo)

    try:
        out = run_attn(single_buffer=True)
    except Exception:
        out = run_attn(single_buffer=False)

    # attention-prob dropout and trailing nn.Dropout(0.1) -> identity (eval)
    return out


# ---------------------------------------------------------------------------
# Pure-JAX f32 reference (same math) for a correctness check
# ---------------------------------------------------------------------------
def _reference_forward(params, hidden_states, attention_mask, num_heads):
    B, S, H = hidden_states.shape
    dh = H // num_heads
    lin = lambda x, w, b: x @ w + b
    q = lin(lin(hidden_states, params['wq1'], params['bq1']),
            params['wq2'], params['bq2']) * (1.0 / math.sqrt(dh))
    k = lin(lin(hidden_states, params['wk1'], params['bk1']),
            params['wk2'], params['bk2'])
    v = lin(lin(hidden_states, params['wv1'], params['bv1']),
            params['wv2'], params['bv2'])
    qh = q.reshape(B, S, num_heads, dh).transpose(0, 2, 1, 3)
    kh = k.reshape(B, S, num_heads, dh).transpose(0, 2, 1, 3)
    vh = v.reshape(B, S, num_heads, dh).transpose(0, 2, 1, 3)
    s = jnp.einsum('bhqd,bhkd->bhqk', qh, kh)
    if attention_mask is not None:
        s = s + jnp.where(attention_mask != 0, -1e9, 0.0)[:, None, None, :]
    p = jax.nn.softmax(s, axis=-1)
    ctx = jnp.einsum('bhqk,bhkd->bhqd', p, vh)
    ctx = ctx.transpose(0, 2, 1, 3).reshape(B, S, H)
    return ctx @ params['wo'] + params['bo']


# ---------------------------------------------------------------------------
# deterministic parameter init (weights stored (in, out) == torch W.T)
# ---------------------------------------------------------------------------
def init_params(key, hidden_size):
    H = hidden_size
    ks = jax.random.split(key, 14)
    w = lambda k: jax.random.normal(k, (H, H), jnp.float32) * 0.02
    b = lambda k: jax.random.uniform(k, (H,), jnp.float32, -0.05, 0.05)
    return {
        'wq1': w(ks[0]), 'bq1': b(ks[1]),     # self.query
        'wk1': w(ks[2]), 'bk1': b(ks[3]),     # self.key
        'wv1': w(ks[4]), 'bv1': b(ks[5]),     # self.value
        'wq2': w(ks[6]), 'bq2': b(ks[7]),     # MHA in_proj (q)
        'wk2': w(ks[8]), 'bk2': b(ks[9]),     # MHA in_proj (k)
        'wv2': w(ks[10]), 'bv2': b(ks[11]),   # MHA in_proj (v)
        'wo': w(ks[12]), 'bo': b(ks[13]),     # MHA out_proj
    }


# ---------------------------------------------------------------------------
if __name__ == "__main__":
    hidden_size = 32
    num_attention_heads = 4
    B, S = 2, 8

    key = jax.random.PRNGKey(0)
    k_p, k_x = jax.random.split(key)
    params = init_params(k_p, hidden_size)
    hidden_states = jax.random.normal(k_x, (B, S, hidden_size), jnp.float32)
    # torch bool attn_mask semantics: nonzero entries are BLOCKED key positions
    attention_mask = jnp.array([[0] * S, [0] * 5 + [1] * 3], jnp.int32)

    out = bert_attention_forward(params, hidden_states, attention_mask,
                                 num_attention_heads)
    jax.block_until_ready(out)
    assert out.shape == (B, S, hidden_size) and out.dtype == jnp.bfloat16

    ref = _reference_forward(params, hidden_states, attention_mask,
                             num_attention_heads)
    err = float(jnp.max(jnp.abs(out.astype(jnp.float32) - ref)))
    assert err < 1e-2, f"mismatch vs f32 reference: max abs err = {err}"
    print("KERNEL_OK")
</pallas_src>

<mosaic_0001>
module attributes {stable_mosaic.version = 11 : i64} {
  func.func @_qkv_proj_kernel(%arg0: i32, %arg1: i32, %arg2: memref<1x8x32xbf16, #tpu.memory_space<vmem>>, %arg3: memref<32x32xbf16, #tpu.memory_space<vmem>>, %arg4: memref<1x32xf32, #tpu.memory_space<vmem>>, %arg5: memref<32x32xbf16, #tpu.memory_space<vmem>>, %arg6: memref<1x32xf32, #tpu.memory_space<vmem>>, %arg7: memref<32x32xbf16, #tpu.memory_space<vmem>>, %arg8: memref<1x32xf32, #tpu.memory_space<vmem>>, %arg9: memref<1x4x8x8xbf16, #tpu.memory_space<vmem>>, %arg10: memref<1x4x8x8xbf16, #tpu.memory_space<vmem>>, %arg11: memref<1x4x8x8xbf16, #tpu.memory_space<vmem>>) attributes {dimension_semantics = [#tpu.dimension_semantics<parallel>, #tpu.dimension_semantics<parallel>], iteration_bounds = array<i64: 2, 1>, scalar_prefetch = 0 : i64, scratch_operands = 0 : i64, tpu.core_type = #tpu.core_type<tc>, window_params = [{transform_indices = @transform_0, window_bounds = array<i64: 1, 8, 32>}, {pipeline_mode = #tpu.pipeline_mode<synchronous>, transform_indices = @transform_1, window_bounds = array<i64: 32, 32>}, {pipeline_mode = #tpu.pipeline_mode<synchronous>, transform_indices = @transform_2, window_bounds = array<i64: 1, 32>}, {pipeline_mode = #tpu.pipeline_mode<synchronous>, transform_indices = @transform_3, window_bounds = array<i64: 32, 32>}, {pipeline_mode = #tpu.pipeline_mode<synchronous>, transform_indices = @transform_4, window_bounds = array<i64: 1, 32>}, {pipeline_mode = #tpu.pipeline_mode<synchronous>, transform_indices = @transform_5, window_bounds = array<i64: 32, 32>}, {pipeline_mode = #tpu.pipeline_mode<synchronous>, transform_indices = @transform_6, window_bounds = array<i64: 1, 32>}, {transform_indices = @transform_7, window_bounds = array<i64: 1, 4, 8, 8>}, {transform_indices = @transform_8, window_bounds = array<i64: 1, 4, 8, 8>}, {transform_indices = @transform_9, window_bounds = array<i64: 1, 4, 8, 8>}]} {
    %c0 = arith.constant 0 : index
    %c0_0 = arith.constant 0 : index
    %c0_1 = arith.constant 0 : index
    %0 = vector.load %arg2[%c0, %c0_0, %c0_1] : memref<1x8x32xbf16, #tpu.memory_space<vmem>>, vector<1x8x32xbf16>
    %1 = vector.shape_cast %0 : vector<1x8x32xbf16> to vector<8x32xbf16>
    %c0_2 = arith.constant 0 : index
    %c0_3 = arith.constant 0 : index
    %2 = vector.load %arg3[%c0_2, %c0_3] : memref<32x32xbf16, #tpu.memory_space<vmem>>, vector<32x32xbf16>
    %cst = arith.constant dense<0.000000e+00> : vector<8x32xf32>
    %3 = tpu.matmul %1, %2, %cst {dimension_numbers = #tpu.dot_dimension_numbers<[1], [0], [0], [1], [0, 0, 1, 1], [], []>} : vector<8x32xbf16>, vector<32x32xbf16>, vector<8x32xf32> -> vector<8x32xf32>
    %c0_4 = arith.constant 0 : index
    %c0_5 = arith.constant 0 : index
    %4 = vector.load %arg4[%c0_4, %c0_5] : memref<1x32xf32, #tpu.memory_space<vmem>>, vector<1x32xf32>
    %5 = vector.broadcast %4 : vector<1x32xf32> to vector<8x32xf32>
    %6 = arith.addf %3, %5 : vector<8x32xf32>
    %7 = arith.truncf %6 : vector<8x32xf32> to vector<8x32xbf16>
    %c0_6 = arith.constant 0 : index
    %c0_7 = arith.constant 0 : index
    %8 = vector.load %arg5[%c0_6, %c0_7] : memref<32x32xbf16, #tpu.memory_space<vmem>>, vector<32x32xbf16>
    %cst_8 = arith.constant dense<0.000000e+00> : vector<8x32xf32>
    %9 = tpu.matmul %1, %8, %cst_8 {dimension_numbers = #tpu.dot_dimension_numbers<[1], [0], [0], [1], [0, 0, 1, 1], [], []>} : vector<8x32xbf16>, vector<32x32xbf16>, vector<8x32xf32> -> vector<8x32xf32>
    %c0_9 = arith.constant 0 : index
    %c0_10 = arith.constant 0 : index
    %10 = vector.load %arg6[%c0_9, %c0_10] : memref<1x32xf32, #tpu.memory_space<vmem>>, vector<1x32xf32>
    %11 = vector.broadcast %10 : vector<1x32xf32> to vector<8x32xf32>
    %12 = arith.addf %9, %11 : vector<8x32xf32>
    %13 = arith.truncf %12 : vector<8x32xf32> to vector<8x32xbf16>
    %c0_11 = arith.constant 0 : index
    %c0_12 = arith.constant 0 : index
    %14 = vector.load %arg7[%c0_11, %c0_12] : memref<32x32xbf16, #tpu.memory_space<vmem>>, vector<32x32xbf16>
    %cst_13 = arith.constant dense<0.000000e+00> : vector<8x32xf32>
    %15 = tpu.matmul %1, %14, %cst_13 {dimension_numbers = #tpu.dot_dimension_numbers<[1], [0], [0], [1], [0, 0, 1, 1], [], []>} : vector<8x32xbf16>, vector<32x32xbf16>, vector<8x32xf32> -> vector<8x32xf32>
    %c0_14 = arith.constant 0 : index
    %c0_15 = arith.constant 0 : index
    %16 = vector.load %arg8[%c0_14, %c0_15] : memref<1x32xf32, #tpu.memory_space<vmem>>, vector<1x32xf32>
    %17 = vector.broadcast %16 : vector<1x32xf32> to vector<8x32xf32>
    %18 = arith.addf %15, %17 : vector<8x32xf32>
    %19 = arith.truncf %18 : vector<8x32xf32> to vector<8x32xbf16>
    %20 = vector.extract_strided_slice %7 {offsets = [0, 0], sizes = [8, 8], strides = [1, 1]} : vector<8x32xbf16> to vector<8x8xbf16>
    %c0_16 = arith.constant 0 : index
    %c0_17 = arith.constant 0 : index
    %c0_18 = arith.constant 0 : index
    %c0_19 = arith.constant 0 : index
    %21 = vector.load %arg9[%c0_16, %c0_17, %c0_18, %c0_19] : memref<1x4x8x8xbf16, #tpu.memory_space<vmem>>, vector<1x1x8x8xbf16>
    %22 = vector.shape_cast %21 : vector<1x1x8x8xbf16> to vector<8x8xbf16>
    %23 = vector.shape_cast %20 : vector<8x8xbf16> to vector<1x1x8x8xbf16>
    tpu.vector_store %arg9[%c0_16, %c0_17, %c0_18, %c0_19], %23 {strides = array<i32>} : memref<1x4x8x8xbf16, #tpu.memory_space<vmem>>, vector<1x1x8x8xbf16>,
    %24 = vector.extract_strided_slice %13 {offsets = [0, 0], sizes = [8, 8], strides = [1, 1]} : vector<8x32xbf16> to vector<8x8xbf16>
    %c0_20 = arith.constant 0 : index
    %c0_21 = arith.constant 0 : index
    %c0_22 = arith.constant 0 : index
    %c0_23 = arith.constant 0 : index
    %25 = vector.load %arg10[%c0_20, %c0_21, %c0_22, %c0_23] : memref<1x4x8x8xbf16, #tpu.memory_space<vmem>>, vector<1x1x8x8xbf16>
    %26 = vector.shape_cast %25 : vector<1x1x8x8xbf16> to vector<8x8xbf16>
    %27 = vector.shape_cast %24 : vector<8x8xbf16> to vector<1x1x8x8xbf16>
    tpu.vector_store %arg10[%c0_20, %c0_21, %c0_22, %c0_23], %27 {strides = array<i32>} : memref<1x4x8x8xbf16, #tpu.memory_space<vmem>>, vector<1x1x8x8xbf16>,
    %28 = vector.extract_strided_slice %19 {offsets = [0, 0], sizes = [8, 8], strides = [1, 1]} : vector<8x32xbf16> to vector<8x8xbf16>
    %c0_24 = arith.constant 0 : index
    %c0_25 = arith.constant 0 : index
    %c0_26 = arith.constant 0 : index
    %c0_27 = arith.constant 0 : index
    %29 = vector.load %arg11[%c0_24, %c0_25, %c0_26, %c0_27] : memref<1x4x8x8xbf16, #tpu.memory_space<vmem>>, vector<1x1x8x8xbf16>
    %30 = vector.shape_cast %29 : vector<1x1x8x8xbf16> to vector<8x8xbf16>
    %31 = vector.shape_cast %28 : vector<8x8xbf16> to vector<1x1x8x8xbf16>
    tpu.vector_store %arg11[%c0_24, %c0_25, %c0_26, %c0_27], %31 {strides = array<i32>} : memref<1x4x8x8xbf16, #tpu.memory_space<vmem>>, vector<1x1x8x8xbf16>,
    %32 = vector.extract_strided_slice %7 {offsets = [0, 8], sizes = [8, 8], strides = [1, 1]} : vector<8x32xbf16> to vector<8x8xbf16>
    %c0_28 = arith.constant 0 : index
    %c1 = arith.constant 1 : index
    %c0_29 = arith.constant 0 : index
    %c0_30 = arith.constant 0 : index
    %33 = vector.load %arg9[%c0_28, %c1, %c0_29, %c0_30] : memref<1x4x8x8xbf16, #tpu.memory_space<vmem>>, vector<1x1x8x8xbf16>
    %34 = vector.shape_cast %33 : vector<1x1x8x8xbf16> to vector<8x8xbf16>
    %35 = vector.shape_cast %32 : vector<8x8xbf16> to vector<1x1x8x8xbf16>
    tpu.vector_store %arg9[%c0_28, %c1, %c0_29, %c0_30], %35 {strides = array<i32>} : memref<1x4x8x8xbf16, #tpu.memory_space<vmem>>, vector<1x1x8x8xbf16>,
    %36 = vector.extract_strided_slice %13 {offsets = [0, 8], sizes = [8, 8], strides = [1, 1]} : vector<8x32xbf16> to vector<8x8xbf16>
    %c0_31 = arith.constant 0 : index
    %c1_32 = arith.constant 1 : index
    %c0_33 = arith.constant 0 : index
    %c0_34 = arith.constant 0 : index
    %37 = vector.load %arg10[%c0_31, %c1_32, %c0_33, %c0_34] : memref<1x4x8x8xbf16, #tpu.memory_space<vmem>>, vector<1x1x8x8xbf16>
    %38 = vector.shape_cast %37 : vector<1x1x8x8xbf16> to vector<8x8xbf16>
    %39 = vector.shape_cast %36 : vector<8x8xbf16> to vector<1x1x8x8xbf16>
    tpu.vector_store %arg10[%c0_31, %c1_32, %c0_33, %c0_34], %39 {strides = array<i32>} : memref<1x4x8x8xbf16, #tpu.memory_space<vmem>>, vector<1x1x8x8xbf16>,
    %40 = vector.extract_strided_slice %19 {offsets = [0, 8], sizes = [8, 8], strides = [1, 1]} : vector<8x32xbf16> to vector<8x8xbf16>
    %c0_35 = arith.constant 0 : index
    %c1_36 = arith.constant 1 : index
    %c0_37 = arith.constant 0 : index
    %c0_38 = arith.constant 0 : index
    %41 = vector.load %arg11[%c0_35, %c1_36, %c0_37, %c0_38] : memref<1x4x8x8xbf16, #tpu.memory_space<vmem>>, vector<1x1x8x8xbf16>
    %42 = vector.shape_cast %41 : vector<1x1x8x8xbf16> to vector<8x8xbf16>
    %43 = vector.shape_cast %40 : vector<8x8xbf16> to vector<1x1x8x8xbf16>
    tpu.vector_store %arg11[%c0_35, %c1_36, %c0_37, %c0_38], %43 {strides = array<i32>} : memref<1x4x8x8xbf16, #tpu.memory_space<vmem>>, vector<1x1x8x8xbf16>,
    %44 = vector.extract_strided_slice %7 {offsets = [0, 16], sizes = [8, 8], strides = [1, 1]} : vector<8x32xbf16> to vector<8x8xbf16>
    %c0_39 = arith.constant 0 : index
    %c2 = arith.constant 2 : index
    %c0_40 = arith.constant 0 : index
    %c0_41 = arith.constant 0 : index
    %45 = vector.load %arg9[%c0_39, %c2, %c0_40, %c0_41] : memref<1x4x8x8xbf16, #tpu.memory_space<vmem>>, vector<1x1x8x8xbf16>
    %46 = vector.shape_cast %45 : vector<1x1x8x8xbf16> to vector<8x8xbf16>
    %47 = vector.shape_cast %44 : vector<8x8xbf16> to vector<1x1x8x8xbf16>
    tpu.vector_store %arg9[%c0_39, %c2, %c0_40, %c0_41], %47 {strides = array<i32>} : memref<1x4x8x8xbf16, #tpu.memory_space<vmem>>, vector<1x1x8x8xbf16>,
    %48 = vector.extract_strided_slice %13 {offsets = [0, 16], sizes = [8, 8], strides = [1, 1]} : vector<8x32xbf16> to vector<8x8xbf16>
    %c0_42 = arith.constant 0 : index
    %c2_43 = arith.constant 2 : index
    %c0_44 = arith.constant 0 : index
    %c0_45 = arith.constant 0 : index
    %49 = vector.load %arg10[%c0_42, %c2_43, %c0_44, %c0_45] : memref<1x4x8x8xbf16, #tpu.memory_space<vmem>>, vector<1x1x8x8xbf16>
    %50 = vector.shape_cast %49 : vector<1x1x8x8xbf16> to vector<8x8xbf16>
    %51 = vector.shape_cast %48 : vector<8x8xbf16> to vector<1x1x8x8xbf16>
    tpu.vector_store %arg10[%c0_42, %c2_43, %c0_44, %c0_45], %51 {strides = array<i32>} : memref<1x4x8x8xbf16, #tpu.memory_space<vmem>>, vector<1x1x8x8xbf16>,
    %52 = vector.extract_strided_slice %19 {offsets = [0, 16], sizes = [8, 8], strides = [1, 1]} : vector<8x32xbf16> to vector<8x8xbf16>
    %c0_46 = arith.constant 0 : index
    %c2_47 = arith.constant 2 : index
    %c0_48 = arith.constant 0 : index
    %c0_49 = arith.constant 0 : index
    %53 = vector.load %arg11[%c0_46, %c2_47, %c0_48, %c0_49] : memref<1x4x8x8xbf16, #tpu.memory_space<vmem>>, vector<1x1x8x8xbf16>
    %54 = vector.shape_cast %53 : vector<1x1x8x8xbf16> to vector<8x8xbf16>
    %55 = vector.shape_cast %52 : vector<8x8xbf16> to vector<1x1x8x8xbf16>
    tpu.vector_store %arg11[%c0_46, %c2_47, %c0_48, %c0_49], %55 {strides = array<i32>} : memref<1x4x8x8xbf16, #tpu.memory_space<vmem>>, vector<1x1x8x8xbf16>,
    %56 = vector.extract_strided_slice %7 {offsets = [0, 24], sizes = [8, 8], strides = [1, 1]} : vector<8x32xbf16> to vector<8x8xbf16>
    %c0_50 = arith.constant 0 : index
    %c3 = arith.constant 3 : index
    %c0_51 = arith.constant 0 : index
    %c0_52 = arith.constant 0 : index
    %57 = vector.load %arg9[%c0_50, %c3, %c0_51, %c0_52] : memref<1x4x8x8xbf16, #tpu.memory_space<vmem>>, vector<1x1x8x8xbf16>
    %58 = vector.shape_cast %57 : vector<1x1x8x8xbf16> to vector<8x8xbf16>
    %59 = vector.shape_cast %56 : vector<8x8xbf16> to vector<1x1x8x8xbf16>
    tpu.vector_store %arg9[%c0_50, %c3, %c0_51, %c0_52], %59 {strides = array<i32>} : memref<1x4x8x8xbf16, #tpu.memory_space<vmem>>, vector<1x1x8x8xbf16>,
    %60 = vector.extract_strided_slice %13 {offsets = [0, 24], sizes = [8, 8], strides = [1, 1]} : vector<8x32xbf16> to vector<8x8xbf16>
    %c0_53 = arith.constant 0 : index
    %c3_54 = arith.constant 3 : index
    %c0_55 = arith.constant 0 : index
    %c0_56 = arith.constant 0 : index
    %61 = vector.load %arg10[%c0_53, %c3_54, %c0_55, %c0_56] : memref<1x4x8x8xbf16, #tpu.memory_space<vmem>>, vector<1x1x8x8xbf16>
    %62 = vector.shape_cast %61 : vector<1x1x8x8xbf16> to vector<8x8xbf16>
    %63 = vector.shape_cast %60 : vector<8x8xbf16> to vector<1x1x8x8xbf16>
    tpu.vector_store %arg10[%c0_53, %c3_54, %c0_55, %c0_56], %63 {strides = array<i32>} : memref<1x4x8x8xbf16, #tpu.memory_space<vmem>>, vector<1x1x8x8xbf16>,
    %64 = vector.extract_strided_slice %19 {offsets = [0, 24], sizes = [8, 8], strides = [1, 1]} : vector<8x32xbf16> to vector<8x8xbf16>
    %c0_57 = arith.constant 0 : index
    %c3_58 = arith.constant 3 : index
    %c0_59 = arith.constant 0 : index
    %c0_60 = arith.constant 0 : index
    %65 = vector.load %arg11[%c0_57, %c3_58, %c0_59, %c0_60] : memref<1x4x8x8xbf16, #tpu.memory_space<vmem>>, vector<1x1x8x8xbf16>
    %66 = vector.shape_cast %65 : vector<1x1x8x8xbf16> to vector<8x8xbf16>
    %67 = vector.shape_cast %64 : vector<8x8xbf16> to vector<1x1x8x8xbf16>
    tpu.vector_store %arg11[%c0_57, %c3_58, %c0_59, %c0_60], %67 {strides = array<i32>} : memref<1x4x8x8xbf16, #tpu.memory_space<vmem>>, vector<1x1x8x8xbf16>,
    return
  }
  func.func @transform_0(%arg0: i32, %arg1: i32) -> (i32, i32, i32) {
    %c0_i32 = arith.constant 0 : i32
    %c0_i32_0 = arith.constant 0 : i32
    return %arg0, %arg1, %c0_i32 : i32, i32, i32
  }
  func.func @transform_1(%arg0: i32, %arg1: i32) -> (i32, i32) {
    %c0_i32 = arith.constant 0 : i32
    %c0_i32_0 = arith.constant 0 : i32
    %c0_i32_1 = arith.constant 0 : i32
    return %c0_i32, %c0_i32_0 : i32, i32
  }
  func.func @transform_2(%arg0: i32, %arg1: i32) -> (i32, i32) {
    %c0_i32 = arith.constant 0 : i32
    %c0_i32_0 = arith.constant 0 : i32
    %c0_i32_1 = arith.constant 0 : i32
    return %c0_i32, %c0_i32_0 : i32, i32
  }
  func.func @transform_3(%arg0: i32, %arg1: i32) -> (i32, i32) {
    %c0_i32 = arith.constant 0 : i32
    %c0_i32_0 = arith.constant 0 : i32
    %c0_i32_1 = arith.constant 0 : i32
    return %c0_i32, %c0_i32_0 : i32, i32
  }
  func.func @transform_4(%arg0: i32, %arg1: i32) -> (i32, i32) {
    %c0_i32 = arith.constant 0 : i32
    %c0_i32_0 = arith.constant 0 : i32
    %c0_i32_1 = arith.constant 0 : i32
    return %c0_i32, %c0_i32_0 : i32, i32
  }
  func.func @transform_5(%arg0: i32, %arg1: i32) -> (i32, i32) {
    %c0_i32 = arith.constant 0 : i32
    %c0_i32_0 = arith.constant 0 : i32
    %c0_i32_1 = arith.constant 0 : i32
    return %c0_i32, %c0_i32_0 : i32, i32
  }
  func.func @transform_6(%arg0: i32, %arg1: i32) -> (i32, i32) {
    %c0_i32 = arith.constant 0 : i32
    %c0_i32_0 = arith.constant 0 : i32
    %c0_i32_1 = arith.constant 0 : i32
    return %c0_i32, %c0_i32_0 : i32, i32
  }
  func.func @transform_7(%arg0: i32, %arg1: i32) -> (i32, i32, i32, i32) {
    %c0_i32 = arith.constant 0 : i32
    %c0_i32_0 = arith.constant 0 : i32
    %c0_i32_1 = arith.constant 0 : i32
    return %arg0, %c0_i32, %arg1, %c0_i32_0 : i32, i32, i32, i32
  }
  func.func @transform_8(%arg0: i32, %arg1: i32) -> (i32, i32, i32, i32) {
    %c0_i32 = arith.constant 0 : i32
    %c0_i32_0 = arith.constant 0 : i32
    %c0_i32_1 = arith.constant 0 : i32
    return %arg0, %c0_i32, %arg1, %c0_i32_0 : i32, i32, i32, i32
  }
  func.func @transform_9(%arg0: i32, %arg1: i32) -> (i32, i32, i32, i32) {
    %c0_i32 = arith.constant 0 : i32
    %c0_i32_0 = arith.constant 0 : i32
    %c0_i32_1 = arith.constant 0 : i32
    return %arg0, %c0_i32, %arg1, %c0_i32_0 : i32, i32, i32, i32
  }
}

module attributes {stable_mosaic.version = 11 : i64} {
  func.func @_qkv_proj_kernel(%arg0: i32, %arg1: i32, %arg2: memref<1x8x32xbf16, #tpu.memory_space<vmem>>, %arg3: memref<32x32xbf16, #tpu.memory_space<vmem>>, %arg4: memref<1x32xf32, #tpu.memory_space<vmem>>, %arg5: memref<32x32xbf16, #tpu.memory_space<vmem>>, %arg6: memref<1x32xf32, #tpu.memory_space<vmem>>, %arg7: memref<32x32xbf16, #tpu.memory_space<vmem>>, %arg8: memref<1x32xf32, #tpu.memory_space<vmem>>, %arg9: memref<1x4x8x8xbf16, #tpu.memory_space<vmem>>, %arg10: memref<1x4x8x8xbf16, #tpu.memory_space<vmem>>, %arg11: memref<1x4x8x8xbf16, #tpu.memory_space<vmem>>) attributes {dimension_semantics = [#tpu.dimension_semantics<parallel>, #tpu.dimension_semantics<parallel>], iteration_bounds = array<i64: 2, 1>, scalar_prefetch = 0 : i64, scratch_operands = 0 : i64, tpu.core_type = #tpu.core_type<tc>, window_params = [{transform_indices = @transform_0, window_bounds = array<i64: 1, 8, 32>}, {pipeline_mode = #tpu.pipeline_mode<synchronous>, transform_indices = @transform_1, window_bounds = array<i64: 32, 32>}, {pipeline_mode = #tpu.pipeline_mode<synchronous>, transform_indices = @transform_2, window_bounds = array<i64: 1, 32>}, {pipeline_mode = #tpu.pipeline_mode<synchronous>, transform_indices = @transform_3, window_bounds = array<i64: 32, 32>}, {pipeline_mode = #tpu.pipeline_mode<synchronous>, transform_indices = @transform_4, window_bounds = array<i64: 1, 32>}, {pipeline_mode = #tpu.pipeline_mode<synchronous>, transform_indices = @transform_5, window_bounds = array<i64: 32, 32>}, {pipeline_mode = #tpu.pipeline_mode<synchronous>, transform_indices = @transform_6, window_bounds = array<i64: 1, 32>}, {transform_indices = @transform_7, window_bounds = array<i64: 1, 4, 8, 8>}, {transform_indices = @transform_8, window_bounds = array<i64: 1, 4, 8, 8>}, {transform_indices = @transform_9, window_bounds = array<i64: 1, 4, 8, 8>}]} {
    %c0 = arith.constant 0 : index
    %c0_0 = arith.constant 0 : index
    %c0_1 = arith.constant 0 : index
    %0 = vector.load %arg2[%c0, %c0_0, %c0_1] : memref<1x8x32xbf16, #tpu.memory_space<vmem>>, vector<1x8x32xbf16>
    %1 = vector.shape_cast %0 : vector<1x8x32xbf16> to vector<8x32xbf16>
    %c0_2 = arith.constant 0 : index
    %c0_3 = arith.constant 0 : index
    %2 = vector.load %arg3[%c0_2, %c0_3] : memref<32x32xbf16, #tpu.memory_space<vmem>>, vector<32x32xbf16>
    %cst = arith.constant dense<0.000000e+00> : vector<8x32xf32>
    %3 = tpu.matmul %1, %2, %cst {dimension_numbers = #tpu.dot_dimension_numbers<[1], [0], [0], [1], [0, 0, 1, 1], [], []>} : vector<8x32xbf16>, vector<32x32xbf16>, vector<8x32xf32> -> vector<8x32xf32>
    %c0_4 = arith.constant 0 : index
    %c0_5 = arith.constant 0 : index
    %4 = vector.load %arg4[%c0_4, %c0_5] : memref<1x32xf32, #tpu.memory_space<vmem>>, vector<1x32xf32>
    %5 = vector.broadcast %4 : vector<1x32xf32> to vector<8x32xf32>
    %6 = arith.addf %3, %5 : vector<8x32xf32>
    %7 = arith.truncf %6 : vector<8x32xf32> to vector<8x32xbf16>
    %c0_6 = arith.constant 0 : index
    %c0_7 = arith.constant 0 : index
    %8 = vector.load %arg5[%c0_6, %c0_7] : memref<32x32xbf16, #tpu.memory_space<vmem>>, vector<32x32xbf16>
    %cst_8 = arith.constant dense<0.000000e+00> : vector<8x32xf32>
    %9 = tpu.matmul %1, %8, %cst_8 {dimension_numbers = #tpu.dot_dimension_numbers<[1], [0], [0], [1], [0, 0, 1, 1], [], []>} : vector<8x32xbf16>, vector<32x32xbf16>, vector<8x32xf32> -> vector<8x32xf32>
    %c0_9 = arith.constant 0 : index
    %c0_10 = arith.constant 0 : index
    %10 = vector.load %arg6[%c0_9, %c0_10] : memref<1x32xf32, #tpu.memory_space<vmem>>, vector<1x32xf32>
    %11 = vector.broadcast %10 : vector<1x32xf32> to vector<8x32xf32>
    %12 = arith.addf %9, %11 : vector<8x32xf32>
    %13 = arith.truncf %12 : vector<8x32xf32> to vector<8x32xbf16>
    %c0_11 = arith.constant 0 : index
    %c0_12 = arith.constant 0 : index
    %14 = vector.load %arg7[%c0_11, %c0_12] : memref<32x32xbf16, #tpu.memory_space<vmem>>, vector<32x32xbf16>
    %cst_13 = arith.constant dense<0.000000e+00> : vector<8x32xf32>
    %15 = tpu.matmul %1, %14, %cst_13 {dimension_numbers = #tpu.dot_dimension_numbers<[1], [0], [0], [1], [0, 0, 1, 1], [], []>} : vector<8x32xbf16>, vector<32x32xbf16>, vector<8x32xf32> -> vector<8x32xf32>
    %c0_14 = arith.constant 0 : index
    %c0_15 = arith.constant 0 : index
    %16 = vector.load %arg8[%c0_14, %c0_15] : memref<1x32xf32, #tpu.memory_space<vmem>>, vector<1x32xf32>
    %17 = vector.broadcast %16 : vector<1x32xf32> to vector<8x32xf32>
    %18 = arith.addf %15, %17 : vector<8x32xf32>
    %19 = arith.truncf %18 : vector<8x32xf32> to vector<8x32xbf16>
    %20 = vector.extract_strided_slice %7 {offsets = [0, 0], sizes = [8, 8], strides = [1, 1]} : vector<8x32xbf16> to vector<8x8xbf16>
    %c0_16 = arith.constant 0 : index
    %c0_17 = arith.constant 0 : index
    %c0_18 = arith.constant 0 : index
    %c0_19 = arith.constant 0 : index
    %21 = vector.load %arg9[%c0_16, %c0_17, %c0_18, %c0_19] : memref<1x4x8x8xbf16, #tpu.memory_space<vmem>>, vector<1x1x8x8xbf16>
    %22 = vector.shape_cast %21 : vector<1x1x8x8xbf16> to vector<8x8xbf16>
    %23 = vector.shape_cast %20 : vector<8x8xbf16> to vector<1x1x8x8xbf16>
    tpu.vector_store %arg9[%c0_16, %c0_17, %c0_18, %c0_19], %23 {strides = array<i32>} : memref<1x4x8x8xbf16, #tpu.memory_space<vmem>>, vector<1x1x8x8xbf16>,
    %24 = vector.extract_strided_slice %13 {offsets = [0, 0], sizes = [8, 8], strides = [1, 1]} : vector<8x32xbf16> to vector<8x8xbf16>
    %c0_20 = arith.constant 0 : index
    %c0_21 = arith.constant 0 : index
    %c0_22 = arith.constant 0 : index
    %c0_23 = arith.constant 0 : index
    %25 = vector.load %arg10[%c0_20, %c0_21, %c0_22, %c0_23] : memref<1x4x8x8xbf16, #tpu.memory_space<vmem>>, vector<1x1x8x8xbf16>
    %26 = vector.shape_cast %25 : vector<1x1x8x8xbf16> to vector<8x8xbf16>
    %27 = vector.shape_cast %24 : vector<8x8xbf16> to vector<1x1x8x8xbf16>
    tpu.vector_store %arg10[%c0_20, %c0_21, %c0_22, %c0_23], %27 {strides = array<i32>} : memref<1x4x8x8xbf16, #tpu.memory_space<vmem>>, vector<1x1x8x8xbf16>,
    %28 = vector.extract_strided_slice %19 {offsets = [0, 0], sizes = [8, 8], strides = [1, 1]} : vector<8x32xbf16> to vector<8x8xbf16>
    %c0_24 = arith.constant 0 : index
    %c0_25 = arith.constant 0 : index
    %c0_26 = arith.constant 0 : index
    %c0_27 = arith.constant 0 : index
    %29 = vector.load %arg11[%c0_24, %c0_25, %c0_26, %c0_27] : memref<1x4x8x8xbf16, #tpu.memory_space<vmem>>, vector<1x1x8x8xbf16>
    %30 = vector.shape_cast %29 : vector<1x1x8x8xbf16> to vector<8x8xbf16>
    %31 = vector.shape_cast %28 : vector<8x8xbf16> to vector<1x1x8x8xbf16>
    tpu.vector_store %arg11[%c0_24, %c0_25, %c0_26, %c0_27], %31 {strides = array<i32>} : memref<1x4x8x8xbf16, #tpu.memory_space<vmem>>, vector<1x1x8x8xbf16>,
    %32 = vector.extract_strided_slice %7 {offsets = [0, 8], sizes = [8, 8], strides = [1, 1]} : vector<8x32xbf16> to vector<8x8xbf16>
    %c0_28 = arith.constant 0 : index
    %c1 = arith.constant 1 : index
    %c0_29 = arith.constant 0 : index
    %c0_30 = arith.constant 0 : index
    %33 = vector.load %arg9[%c0_28, %c1, %c0_29, %c0_30] : memref<1x4x8x8xbf16, #tpu.memory_space<vmem>>, vector<1x1x8x8xbf16>
    %34 = vector.shape_cast %33 : vector<1x1x8x8xbf16> to vector<8x8xbf16>
    %35 = vector.shape_cast %32 : vector<8x8xbf16> to vector<1x1x8x8xbf16>
    tpu.vector_store %arg9[%c0_28, %c1, %c0_29, %c0_30], %35 {strides = array<i32>} : memref<1x4x8x8xbf16, #tpu.memory_space<vmem>>, vector<1x1x8x8xbf16>,
    %36 = vector.extract_strided_slice %13 {offsets = [0, 8], sizes = [8, 8], strides = [1, 1]} : vector<8x32xbf16> to vector<8x8xbf16>
    %c0_31 = arith.constant 0 : index
    %c1_32 = arith.constant 1 : index
    %c0_33 = arith.constant 0 : index
    %c0_34 = arith.constant 0 : index
    %37 = vector.load %arg10[%c0_31, %c1_32, %c0_33, %c0_34] : memref<1x4x8x8xbf16, #tpu.memory_space<vmem>>, vector<1x1x8x8xbf16>
    %38 = vector.shape_cast %37 : vector<1x1x8x8xbf16> to vector<8x8xbf16>
    %39 = vector.shape_cast %36 : vector<8x8xbf16> to vector<1x1x8x8xbf16>
    tpu.vector_store %arg10[%c0_31, %c1_32, %c0_33, %c0_34], %39 {strides = array<i32>} : memref<1x4x8x8xbf16, #tpu.memory_space<vmem>>, vector<1x1x8x8xbf16>,
    %40 = vector.extract_strided_slice %19 {offsets = [0, 8], sizes = [8, 8], strides = [1, 1]} : vector<8x32xbf16> to vector<8x8xbf16>
    %c0_35 = arith.constant 0 : index
    %c1_36 = arith.constant 1 : index
    %c0_37 = arith.constant 0 : index
    %c0_38 = arith.constant 0 : index
    %41 = vector.load %arg11[%c0_35, %c1_36, %c0_37, %c0_38] : memref<1x4x8x8xbf16, #tpu.memory_space<vmem>>, vector<1x1x8x8xbf16>
    %42 = vector.shape_cast %41 : vector<1x1x8x8xbf16> to vector<8x8xbf16>
    %43 = vector.shape_cast %40 : vector<8x8xbf16> to vector<1x1x8x8xbf16>
    tpu.vector_store %arg11[%c0_35, %c1_36, %c0_37, %c0_38], %43 {strides = array<i32>} : memref<1x4x8x8xbf16, #tpu.memory_space<vmem>>, vector<1x1x8x8xbf16>,
    %44 = vector.extract_strided_slice %7 {offsets = [0, 16], sizes = [8, 8], strides = [1, 1]} : vector<8x32xbf16> to vector<8x8xbf16>
    %c0_39 = arith.constant 0 : index
    %c2 = arith.constant 2 : index
    %c0_40 = arith.constant 0 : index
    %c0_41 = arith.constant 0 : index
    %45 = vector.load %arg9[%c0_39, %c2, %c0_40, %c0_41] : memref<1x4x8x8xbf16, #tpu.memory_space<vmem>>, vector<1x1x8x8xbf16>
    %46 = vector.shape_cast %45 : vector<1x1x8x8xbf16> to vector<8x8xbf16>
    %47 = vector.shape_cast %44 : vector<8x8xbf16> to vector<1x1x8x8xbf16>
    tpu.vector_store %arg9[%c0_39, %c2, %c0_40, %c0_41], %47 {strides = array<i32>} : memref<1x4x8x8xbf16, #tpu.memory_space<vmem>>, vector<1x1x8x8xbf16>,
    %48 = vector.extract_strided_slice %13 {offsets = [0, 16], sizes = [8, 8], strides = [1, 1]} : vector<8x32xbf16> to vector<8x8xbf16>
    %c0_42 = arith.constant 0 : index
    %c2_43 = arith.constant 2 : index
    %c0_44 = arith.constant 0 : index
    %c0_45 = arith.constant 0 : index
    %49 = vector.load %arg10[%c0_42, %c2_43, %c0_44, %c0_45] : memref<1x4x8x8xbf16, #tpu.memory_space<vmem>>, vector<1x1x8x8xbf16>
    %50 = vector.shape_cast %49 : vector<1x1x8x8xbf16> to vector<8x8xbf16>
    %51 = vector.shape_cast %48 : vector<8x8xbf16> to vector<1x1x8x8xbf16>
    tpu.vector_store %arg10[%c0_42, %c2_43, %c0_44, %c0_45], %51 {strides = array<i32>} : memref<1x4x8x8xbf16, #tpu.memory_space<vmem>>, vector<1x1x8x8xbf16>,
    %52 = vector.extract_strided_slice %19 {offsets = [0, 16], sizes = [8, 8], strides = [1, 1]} : vector<8x32xbf16> to vector<8x8xbf16>
    %c0_46 = arith.constant 0 : index
    %c2_47 = arith.constant 2 : index
    %c0_48 = arith.constant 0 : index
    %c0_49 = arith.constant 0 : index
    %53 = vector.load %arg11[%c0_46, %c2_47, %c0_48, %c0_49] : memref<1x4x8x8xbf16, #tpu.memory_space<vmem>>, vector<1x1x8x8xbf16>
    %54 = vector.shape_cast %53 : vector<1x1x8x8xbf16> to vector<8x8xbf16>
    %55 = vector.shape_cast %52 : vector<8x8xbf16> to vector<1x1x8x8xbf16>
    tpu.vector_store %arg11[%c0_46, %c2_47, %c0_48, %c0_49], %55 {strides = array<i32>} : memref<1x4x8x8xbf16, #tpu.memory_space<vmem>>, vector<1x1x8x8xbf16>,
    %56 = vector.extract_strided_slice %7 {offsets = [0, 24], sizes = [8, 8], strides = [1, 1]} : vector<8x32xbf16> to vector<8x8xbf16>
    %c0_50 = arith.constant 0 : index
    %c3 = arith.constant 3 : index
    %c0_51 = arith.constant 0 : index
    %c0_52 = arith.constant 0 : index
    %57 = vector.load %arg9[%c0_50, %c3, %c0_51, %c0_52] : memref<1x4x8x8xbf16, #tpu.memory_space<vmem>>, vector<1x1x8x8xbf16>
    %58 = vector.shape_cast %57 : vector<1x1x8x8xbf16> to vector<8x8xbf16>
    %59 = vector.shape_cast %56 : vector<8x8xbf16> to vector<1x1x8x8xbf16>
    tpu.vector_store %arg9[%c0_50, %c3, %c0_51, %c0_52], %59 {strides = array<i32>} : memref<1x4x8x8xbf16, #tpu.memory_space<vmem>>, vector<1x1x8x8xbf16>,
    %60 = vector.extract_strided_slice %13 {offsets = [0, 24], sizes = [8, 8], strides = [1, 1]} : vector<8x32xbf16> to vector<8x8xbf16>
    %c0_53 = arith.constant 0 : index
    %c3_54 = arith.constant 3 : index
    %c0_55 = arith.constant 0 : index
    %c0_56 = arith.constant 0 : index
    %61 = vector.load %arg10[%c0_53, %c3_54, %c0_55, %c0_56] : memref<1x4x8x8xbf16, #tpu.memory_space<vmem>>, vector<1x1x8x8xbf16>
    %62 = vector.shape_cast %61 : vector<1x1x8x8xbf16> to vector<8x8xbf16>
    %63 = vector.shape_cast %60 : vector<8x8xbf16> to vector<1x1x8x8xbf16>
    tpu.vector_store %arg10[%c0_53, %c3_54, %c0_55, %c0_56], %63 {strides = array<i32>} : memref<1x4x8x8xbf16, #tpu.memory_space<vmem>>, vector<1x1x8x8xbf16>,
    %64 = vector.extract_strided_slice %19 {offsets = [0, 24], sizes = [8, 8], strides = [1, 1]} : vector<8x32xbf16> to vector<8x8xbf16>
    %c0_57 = arith.constant 0 : index
    %c3_58 = arith.constant 3 : index
    %c0_59 = arith.constant 0 : index
    %c0_60 = arith.constant 0 : index
    %65 = vector.load %arg11[%c0_57, %c3_58, %c0_59, %c0_60] : memref<1x4x8x8xbf16, #tpu.memory_space<vmem>>, vector<1x1x8x8xbf16>
    %66 = vector.shape_cast %65 : vector<1x1x8x8xbf16> to vector<8x8xbf16>
    %67 = vector.shape_cast %64 : vector<8x8xbf16> to vector<1x1x8x8xbf16>
    tpu.vector_store %arg11[%c0_57, %c3_58, %c0_59, %c0_60], %67 {strides = array<i32>} : memref<1x4x8x8xbf16, #tpu.memory_space<vmem>>, vector<1x1x8x8xbf16>,
    return
  }
  func.func @transform_0(%arg0: i32, %arg1: i32) -> (i32, i32, i32) {
    %c0_i32 = arith.constant 0 : i32
    %c0_i32_0 = arith.constant 0 : i32
    return %arg0, %arg1, %c0_i32 : i32, i32, i32
  }
  func.func @transform_1(%arg0: i32, %arg1: i32) -> (i32, i32) {
    %c0_i32 = arith.constant 0 : i32
    %c0_i32_0 = arith.constant 0 : i32
    %c0_i32_1 = arith.constant 0 : i32
    return %c0_i32, %c0_i32_0 : i32, i32
  }
  func.func @transform_2(%arg0: i32, %arg1: i32) -> (i32, i32) {
    %c0_i32 = arith.constant 0 : i32
    %c0_i32_0 = arith.constant 0 : i32
    %c0_i32_1 = arith.constant 0 : i32
    return %c0_i32, %c0_i32_0 : i32, i32
  }
  func.func @transform_3(%arg0: i32, %arg1: i32) -> (i32, i32) {
    %c0_i32 = arith.constant 0 : i32
    %c0_i32_0 = arith.constant 0 : i32
    %c0_i32_1 = arith.constant 0 : i32
    return %c0_i32, %c0_i32_0 : i32, i32
  }
  func.func @transform_4(%arg0: i32, %arg1: i32) -> (i32, i32) {
    %c0_i32 = arith.constant 0 : i32
    %c0_i32_0 = arith.constant 0 : i32
    %c0_i32_1 = arith.constant 0 : i32
    return %c0_i32, %c0_i32_0 : i32, i32
  }
  func.func @transform_5(%arg0: i32, %arg1: i32) -> (i32, i32) {
    %c0_i32 = arith.constant 0 : i32
    %c0_i32_0 = arith.constant 0 : i32
    %c0_i32_1 = arith.constant 0 : i32
    return %c0_i32, %c0_i32_0 : i32, i32
  }
  func.func @transform_6(%arg0: i32, %arg1: i32) -> (i32, i32) {
    %c0_i32 = arith.constant 0 : i32
    %c0_i32_0 = arith.constant 0 : i32
    %c0_i32_1 = arith.constant 0 : i32
    return %c0_i32, %c0_i32_0 : i32, i32
  }
  func.func @transform_7(%arg0: i32, %arg1: i32) -> (i32, i32, i32, i32) {
    %c0_i32 = arith.constant 0 : i32
    %c0_i32_0 = arith.constant 0 : i32
    %c0_i32_1 = arith.constant 0 : i32
    return %arg0, %c0_i32, %arg1, %c0_i32_0 : i32, i32, i32, i32
  }
  func.func @transform_8(%arg0: i32, %arg1: i32) -> (i32, i32, i32, i32) {
    %c0_i32 = arith.constant 0 : i32
    %c0_i32_0 = arith.constant 0 : i32
    %c0_i32_1 = arith.constant 0 : i32
    return %arg0, %c0_i32, %arg1, %c0_i32_0 : i32, i32, i32, i32
  }
  func.func @transform_9(%arg0: i32, %arg1: i32) -> (i32, i32, i32, i32) {
    %c0_i32 = arith.constant 0 : i32
    %c0_i32_0 = arith.constant 0 : i32
    %c0_i32_1 = arith.constant 0 : i32
    return %arg0, %c0_i32, %arg1, %c0_i32_0 : i32, i32, i32, i32
  }
}

</mosaic_0001>

<llo_original>
// kernel: tpu_custom_call.1
$region0: #{tpu_custom_call.1}
  #allocation0 [shape = 'u32[]', space=smem, size = 0x4, offset = 0x4, fixed_abs, tag = 'smem constant byte address 0x4 - core index']
  #allocation1 [shape = 'u32[72,128]{1,0:T(1,128)}', space=vmem, size = 0x9000, scoped, tag = 'internal scratch']
  %s0 = inlined_call_operand.hbm [shape: bf16[2,8,32], index: 0, kind: input, shape index: {}]
  %s1 = inlined_call_operand.hbm [shape: bf16[32,32], index: 1, kind: input, shape index: {}]
  %s2 = inlined_call_operand.vmem [shape: f32[1,32], index: 2, kind: input, shape index: {}]
  %s3 = inlined_call_operand.hbm [shape: bf16[32,32], index: 3, kind: input, shape index: {}]
  %s4 = inlined_call_operand.vmem [shape: f32[1,32], index: 4, kind: input, shape index: {}]
  %s5 = inlined_call_operand.hbm [shape: bf16[32,32], index: 5, kind: input, shape index: {}]
  %s6 = inlined_call_operand.vmem [shape: f32[1,32], index: 6, kind: input, shape index: {}]
  %s7 = inlined_call_operand.hbm [shape: bf16[2,4,8,8], index: 7, kind: output, shape index: {0}]
  %s8 = inlined_call_operand.hbm [shape: bf16[2,4,8,8], index: 8, kind: output, shape index: {1}]
  %s9 = inlined_call_operand.hbm [shape: bf16[2,4,8,8], index: 9, kind: output, shape index: {2}]
  %10 = xla_tuple %s7, %s8, %s9
  %s11 = sld [smem:[#allocation0]]
  $region93: #{tpu_custom_call.1} parent=0
    _
  %s13 = ssub.s32 1, %s11
  %s14 = scalar_select 0, %s13, %s11
  $region1: #{tpu_custom_call.1} parent=0
    #allocation2 [shape = 'u8[4096]{0}', space=vmem, size = 0x1000, scoped, tag = 'input window, operand 0']
    #allocation3 [shape = 's32[2]{0}', space=sflag, size = 0x8, scoped, tag = 'scoped memory for tpu_custom_call.1']
    #allocation4 [shape = 's32[2]{0}', space=sflag, size = 0x8, scoped, tag = 'scoped memory for tpu_custom_call.1']
    #allocation5 [shape = 'u8[8192]{0}', space=vmem, size = 0x2000, scoped, tag = 'input window, operand 1, single buffered']
    #allocation6 [shape = 's32[1]{0}', space=sflag, size = 0x4, scoped, tag = 'scoped memory for tpu_custom_call.1']
    #allocation7 [shape = 'u8[8192]{0}', space=vmem, size = 0x2000, scoped, tag = 'input window, operand 3, single buffered']
    #allocation8 [shape = 'u8[8192]{0}', space=vmem, size = 0x2000, scoped, tag = 'input window, operand 5, single buffered']
    #allocation9 [shape = 's32[1]{0}', space=sflag, size = 0x4, scoped, tag = 'scoped memory for tpu_custom_call.1']
    #allocation10 [shape = 'u8[16384]{0}', space=vmem, size = 0x4000, scoped, tag = 'output window, operand 0']
    #allocation11 [shape = 'u8[16384]{0}', space=vmem, size = 0x4000, scoped, tag = 'output window, operand 1']
    #allocation12 [shape = 's32[2]{0}', space=sflag, size = 0x8, scoped, tag = 'scoped memory for tpu_custom_call.1']
    #allocation13 [shape = 'u8[16384]{0}', space=vmem, size = 0x4000, scoped, tag = 'output window, operand 2']
    %15 = vsyncpa [#allocation3], 0
    %s16 = scalar_lea.sflag [#allocation3], 1
    %17 = vsyncpa %s16, 0
    %18 = vsyncpa [#allocation6], 0
    %19 = vsyncpa [#allocation9], 0
    %20 = vsyncpa [#allocation4], 0
    %s21 = scalar_lea.sflag [#allocation4], 1
    %22 = vsyncpa %s21, 0
    %23 = vsyncpa [#allocation12], 0
    %s24 = scalar_lea.sflag [#allocation12], 1
    %25 = vsyncpa %s24, 0
    loop: start=0, step=1, limit=4
    $region2: #{tpu_custom_call.1} parent=1 // loop_pre_header
      _
    $region3: #{tpu_custom_call.1} parent=1 // loop_header
      %s27 = sphi 0, %s31
      %p28 = scmp.ge.s32.totalorder %s27, 4
      %s34 = sphi 0, %s46
      %s35 = sphi 0, %s42
      %s36 = sphi 0, %s34
      %s37 = sphi 0, %s35
      %s38 = sphi 0, %s36
      %s39 = sphi 0, %s37
      %s51 = sphi 0, %s53
      %s54 = sphi 0, %s51
      %s55 = sphi 0, %s54
      %s71 = sphi 0, %s55
      %s75 = sphi 0, %s75
      %s77 = sphi 0, %s75
      %s78 = sphi 0, %s77
      %s92 = sphi 0, %s78
      %s96 = sphi 0, %s96
      %s98 = sphi 0, %s96
      %s99 = sphi 0, %s98
      %s113 = sphi 0, %s99
      %s117 = sphi 0, %s117
      %s119 = sphi 0, %s117
      %s120 = sphi 0, %s119
      %s134 = sphi 0, %s120
      %s138 = sphi 0, %s138
      %s140 = sphi 0, %s138
      %s141 = sphi 0, %s140
      %s155 = sphi 0, %s141
      %s159 = sphi 0, %s159
      %s161 = sphi 0, %s159
      %s162 = sphi 0, %s161
      %s176 = sphi 0, %s162
      %s180 = sphi 0, %s180
      %s182 = sphi 0, %s180
      %s183 = sphi 0, %s182
      %s197 = sphi 0, %s183
      %s205 = sphi 0, %s207
      %s208 = sphi 0, %s205
      %s209 = sphi 0, %s208
      %s225 = sphi 0, %s209
      %s233 = sphi 0, %s235
      %s236 = sphi 0, %s233
      %s237 = sphi 0, %s236
      %s253 = sphi 0, %s237
      %s261 = sphi 0, %s263
      %s264 = sphi 0, %s261
      %s265 = sphi 0, %s264
      %s281 = sphi 0, %s265
    $region4: #{tpu_custom_call.1} parent=1 // loop_header_branch
      %30 = sbr.rel (%p28) target = $region8
    $region5: #{tpu_custom_call.1} parent=1 // loop_body
      %s32 = ssub.s32 %s27, 1
      %s33 = ssub.s32 %s27, 2
      %s40 = sadd.s32 1, %s35
      %p41 = scmp.ge.s32.totalorder %s40, 1
      %s42 = scalar_select %p41, 0, %s40
      %s43 = sadd.s32 1, %s34
      %s44 = scalar_select %p41, %s43, %s34
      %p45 = scmp.ge.s32.totalorder %s44, 2
      %s46 = scalar_select %p45, 0, %s44
      %s47 = ssub.s32 %s34, %s46
      %s48 = ssub.s32 %s35, %s42
      %s49 = sor.u32 %s47, %s48
      %p50 = scmp.eq.s32.totalorder %s49, 0
      %s52 = sadd.s32 %s51, 1
      %s53 = scalar_select %p50, %s51, %s52
      %p56 = pneg %p50
      %p57 = scmp.eq.s32.totalorder %s27, 1
      %p58 = por %p56, %p57
      %p59 = scmp.ne.s32.totalorder %s51, %s54
      %p60 = scmp.eq.s32.totalorder %s27, 0
      %p61 = por %p59, %p60
      %p62 = scmp.ne.s32.totalorder %s51, %s54
      %p63 = scmp.eq.s32.totalorder %s32, 1
      %p64 = por %p62, %p63
      %p65 = scmp.ne.s32.totalorder %s54, %s55
      %p66 = scmp.eq.s32.totalorder %s32, 0
      %p67 = por %p65, %p66
      %p68 = scmp.ne.s32.totalorder %s54, %s55
      %p69 = scmp.eq.s32.totalorder %s33, 1
      %p70 = por %p68, %p69
      %p72 = scmp.ne.s32.totalorder %s55, %s71
      %p73 = scmp.eq.s32.totalorder %s33, 0
      %p74 = por %p72, %p73
      %s76 = sadd.s32 %s75, 1
      %p79 = scmp.eq.s32.totalorder %s27, 1
      %p80 = scmp.ne.s32.totalorder %s75, %s77
      %p81 = scmp.eq.s32.totalorder %s27, 0
      %p82 = por %p80, %p81
      %p83 = scmp.ne.s32.totalorder %s75, %s77
      %p84 = scmp.eq.s32.totalorder %s32, 1
      %p85 = por %p83, %p84
      %p86 = scmp.ne.s32.totalorder %s77, %s78
      %p87 = scmp.eq.s32.totalorder %s32, 0
      %p88 = por %p86, %p87
      %p89 = scmp.ne.s32.totalorder %s77, %s78
      %p90 = scmp.eq.s32.totalorder %s33, 1
      %p91 = por %p89, %p90
      %p93 = scmp.ne.s32.totalorder %s78, %s92
      %p94 = scmp.eq.s32.totalorder %s33, 0
      %p95 = por %p93, %p94
      %s97 = sadd.s32 %s96, 1
      %p100 = scmp.eq.s32.totalorder %s27, 1
      %p101 = scmp.ne.s32.totalorder %s96, %s98
      %p102 = scmp.eq.s32.totalorder %s27, 0
      %p103 = por %p101, %p102
      %p104 = scmp.ne.s32.totalorder %s96, %s98
      %p105 = scmp.eq.s32.totalorder %s32, 1
      %p106 = por %p104, %p105
      %p107 = scmp.ne.s32.totalorder %s98, %s99
      %p108 = scmp.eq.s32.totalorder %s32, 0
      %p109 = por %p107, %p108
      %p110 = scmp.ne.s32.totalorder %s98, %s99
      %p111 = scmp.eq.s32.totalorder %s33, 1
      %p112 = por %p110, %p111
      %p114 = scmp.ne.s32.totalorder %s99, %s113
      %p115 = scmp.eq.s32.totalorder %s33, 0
      %p116 = por %p114, %p115
      %s118 = sadd.s32 %s117, 1
      %p121 = scmp.eq.s32.totalorder %s27, 1
      %p122 = scmp.ne.s32.totalorder %s117, %s119
      %p123 = scmp.eq.s32.totalorder %s27, 0
      %p124 = por %p122, %p123
      %p125 = scmp.ne.s32.totalorder %s117, %s119
      %p126 = scmp.eq.s32.totalorder %s32, 1
      %p127 = por %p125, %p126
      %p128 = scmp.ne.s32.totalorder %s119, %s120
      %p129 = scmp.eq.s32.totalorder %s32, 0
      %p130 = por %p128, %p129
      %p131 = scmp.ne.s32.totalorder %s119, %s120
      %p132 = scmp.eq.s32.totalorder %s33, 1
      %p133 = por %p131, %p132
      %p135 = scmp.ne.s32.totalorder %s120, %s134
      %p136 = scmp.eq.s32.totalorder %s33, 0
      %p137 = por %p135, %p136
      %s139 = sadd.s32 %s138, 1
      %p142 = scmp.eq.s32.totalorder %s27, 1
      %p143 = scmp.ne.s32.totalorder %s138, %s140
      %p144 = scmp.eq.s32.totalorder %s27, 0
      %p145 = por %p143, %p144
      %p146 = scmp.ne.s32.totalorder %s138, %s140
      %p147 = scmp.eq.s32.totalorder %s32, 1
      %p148 = por %p146, %p147
      %p149 = scmp.ne.s32.totalorder %s140, %s141
      %p150 = scmp.eq.s32.totalorder %s32, 0
      %p151 = por %p149, %p150
      %p152 = scmp.ne.s32.totalorder %s140, %s141
      %p153 = scmp.eq.s32.totalorder %s33, 1
      %p154 = por %p152, %p153
      %p156 = scmp.ne.s32.totalorder %s141, %s155
      %p157 = scmp.eq.s32.totalorder %s33, 0
      %p158 = por %p156, %p157
      %s160 = sadd.s32 %s159, 1
      %p163 = scmp.eq.s32.totalorder %s27, 1
      %p164 = scmp.ne.s32.totalorder %s159, %s161
      %p165 = scmp.eq.s32.totalorder %s27, 0
      %p166 = por %p164, %p165
      %p167 = scmp.ne.s32.totalorder %s159, %s161
      %p168 = scmp.eq.s32.totalorder %s32, 1
      %p169 = por %p167, %p168
      %p170 = scmp.ne.s32.totalorder %s161, %s162
      %p171 = scmp.eq.s32.totalorder %s32, 0
      %p172 = por %p170, %p171
      %p173 = scmp.ne.s32.totalorder %s161, %s162
      %p174 = scmp.eq.s32.totalorder %s33, 1
      %p175 = por %p173, %p174
      %p177 = scmp.ne.s32.totalorder %s162, %s176
      %p178 = scmp.eq.s32.totalorder %s33, 0
      %p179 = por %p177, %p178
      %s181 = sadd.s32 %s180, 1
      %p184 = scmp.eq.s32.totalorder %s27, 1
      %p185 = scmp.ne.s32.totalorder %s180, %s182
      %p186 = scmp.eq.s32.totalorder %s27, 0
      %p187 = por %p185, %p186
      %p188 = scmp.ne.s32.totalorder %s180, %s182
      %p189 = scmp.eq.s32.totalorder %s32, 1
      %p190 = por %p188, %p189
      %p191 = scmp.ne.s32.totalorder %s182, %s183
      %p192 = scmp.eq.s32.totalorder %s32, 0
      %p193 = por %p191, %p192
      %p194 = scmp.ne.s32.totalorder %s182, %s183
      %p195 = scmp.eq.s32.totalorder %s33, 1
      %p196 = por %p194, %p195
      %p198 = scmp.ne.s32.totalorder %s183, %s197
      %p199 = scmp.eq.s32.totalorder %s33, 0
      %p200 = por %p198, %p199
      %s201 = ssub.s32 %s34, %s46
      %s202 = ssub.s32 %s35, %s42
      %s203 = sor.u32 %s201, %s202
      %p204 = scmp.eq.s32.totalorder %s203, 0
      %s206 = sadd.s32 %s205, 1
      %s207 = scalar_select %p204, %s205, %s206
      %p210 = pneg %p204
      %p211 = scmp.eq.s32.totalorder %s27, 1
      %p212 = por %p210, %p211
      %p213 = scmp.ne.s32.totalorder %s205, %s208
      %p214 = scmp.eq.s32.totalorder %s27, 0
      %p215 = por %p213, %p214
      %p216 = scmp.ne.s32.totalorder %s205, %s208
      %p217 = scmp.eq.s32.totalorder %s32, 1
      %p218 = por %p216, %p217
      %p219 = scmp.ne.s32.totalorder %s208, %s209
      %p220 = scmp.eq.s32.totalorder %s32, 0
      %p221 = por %p219, %p220
      %p222 = scmp.ne.s32.totalorder %s208, %s209
      %p223 = scmp.eq.s32.totalorder %s33, 1
      %p224 = por %p222, %p223
      %p226 = scmp.ne.s32.totalorder %s209, %s225
      %p227 = scmp.eq.s32.totalorder %s33, 0
      %p228 = por %p226, %p227
      %s229 = ssub.s32 %s34, %s46
      %s230 = ssub.s32 %s35, %s42
      %s231 = sor.u32 %s229, %s230
      %p232 = scmp.eq.s32.totalorder %s231, 0
      %s234 = sadd.s32 %s233, 1
      %s235 = scalar_select %p232, %s233, %s234
      %p238 = pneg %p232
      %p239 = scmp.eq.s32.totalorder %s27, 1
      %p240 = por %p238, %p239
      %p241 = scmp.ne.s32.totalorder %s233, %s236
      %p242 = scmp.eq.s32.totalorder %s27, 0
      %p243 = por %p241, %p242
      %p244 = scmp.ne.s32.totalorder %s233, %s236
      %p245 = scmp.eq.s32.totalorder %s32, 1
      %p246 = por %p244, %p245
      %p247 = scmp.ne.s32.totalorder %s236, %s237
      %p248 = scmp.eq.s32.totalorder %s32, 0
      %p249 = por %p247, %p248
      %p250 = scmp.ne.s32.totalorder %s236, %s237
      %p251 = scmp.eq.s32.totalorder %s33, 1
      %p252 = por %p250, %p251
      %p254 = scmp.ne.s32.totalorder %s237, %s253
      %p255 = scmp.eq.s32.totalorder %s33, 0
      %p256 = por %p254, %p255
      %s257 = ssub.s32 %s34, %s46
      %s258 = ssub.s32 %s35, %s42
      %s259 = sor.u32 %s257, %s258
      %p260 = scmp.eq.s32.totalorder %s259, 0
      %s262 = sadd.s32 %s261, 1
      %s263 = scalar_select %p260, %s261, %s262
      %p266 = pneg %p260
      %p267 = scmp.eq.s32.totalorder %s27, 1
      %p268 = por %p266, %p267
      %p269 = scmp.ne.s32.totalorder %s261, %s264
      %p270 = scmp.eq.s32.totalorder %s27, 0
      %p271 = por %p269, %p270
      %p272 = scmp.ne.s32.totalorder %s261, %s264
      %p273 = scmp.eq.s32.totalorder %s32, 1
      %p274 = por %p272, %p273
      %p275 = scmp.ne.s32.totalorder %s264, %s265
      %p276 = scmp.eq.s32.totalorder %s32, 0
      %p277 = por %p275, %p276
      %p278 = scmp.ne.s32.totalorder %s264, %s265
      %p279 = scmp.eq.s32.totalorder %s33, 1
      %p280 = por %p278, %p279
      %p282 = scmp.ne.s32.totalorder %s265, %s281
      %p283 = scmp.eq.s32.totalorder %s33, 0
      %p284 = por %p282, %p283
      %p285 = scmp.le.s32.totalorder 1, %s27
      %p286 = scmp.lt.s32.totalorder %s27, 3
      %p287 = pnand %p285, %p286
      %p288 = pneg %p287
      // Predicated region
      $region9: #{tpu_custom_call.1} parent=5 // pred_check
        _
      $region10: #{tpu_custom_call.1} parent=5 // pred_check_branch
        %290 = sbr.rel (%p287) target = $region12
      $region11: #{tpu_custom_call.1} parent=5 // pred_region
        %s291 = ssub.s32 %s27, 1
        // Predicated region
        $region13: #{tpu_custom_call.1} parent=11 // pred_check
          %p292 = pneg %p88
        $region14: #{tpu_custom_call.1} parent=11 // pred_check_branch
          %294 = sbr.rel (%p292) target = $region16
        $region15: #{tpu_custom_call.1} parent=11 // pred_region
          %296 = vsyncadd [#allocation6], 0
          %s297 = sshll.u32 %s1, 4
          %s298 = int_to_ptr.hbm [resolvable:$true] %s297
          %s299 = sshll.u32 [#allocation5], 4
          %s300 = int_to_ptr.vmem [resolvable:$true] %s299
          %305 = dma.hbm_to_vmem [thread:$0]  %s298, 256, %s300, [#allocation6], 64, 64, 4
        $region16: #{tpu_custom_call.1} parent=11 // pred_fallthru
          _
        // Predicated region
        $region17: #{tpu_custom_call.1} parent=11 // pred_check
          %p306 = pneg %p109
        $region18: #{tpu_custom_call.1} parent=11 // pred_check_branch
          %308 = sbr.rel (%p306) target = $region20
        $region19: #{tpu_custom_call.1} parent=11 // pred_region
          _
        $region20: #{tpu_custom_call.1} parent=11 // pred_fallthru
          _
        // Predicated region
        $region21: #{tpu_custom_call.1} parent=11 // pred_check
          %p309 = pneg %p130
        $region22: #{tpu_custom_call.1} parent=11 // pred_check_branch
          %311 = sbr.rel (%p309) target = $region24
        $region23: #{tpu_custom_call.1} parent=11 // pred_region
          %313 = vsyncadd [#allocation6], 0
          %s314 = sshll.u32 %s3, 4
          %s315 = int_to_ptr.hbm [resolvable:$true] %s314
          %s316 = sshll.u32 [#allocation7], 4
          %s317 = int_to_ptr.vmem [resolvable:$true] %s316
          %322 = dma.hbm_to_vmem [thread:$0]  %s315, 256, %s317, [#allocation6], 64, 64, 4
        $region24: #{tpu_custom_call.1} parent=11 // pred_fallthru
          _
        // Predicated region
        $region25: #{tpu_custom_call.1} parent=11 // pred_check
          %p323 = pneg %p151
        $region26: #{tpu_custom_call.1} parent=11 // pred_check_branch
          %325 = sbr.rel (%p323) target = $region28
        $region27: #{tpu_custom_call.1} parent=11 // pred_region
          _
        $region28: #{tpu_custom_call.1} parent=11 // pred_fallthru
          _
        // Predicated region
        $region29: #{tpu_custom_call.1} parent=11 // pred_check
          %p326 = pneg %p172
        $region30: #{tpu_custom_call.1} parent=11 // pred_check_branch
          %328 = sbr.rel (%p326) target = $region32
        $region31: #{tpu_custom_call.1} parent=11 // pred_region
          %330 = vsyncadd [#allocation9], 0
          %s331 = sshll.u32 %s5, 4
          %s332 = int_to_ptr.hbm [resolvable:$true] %s331
          %s333 = sshll.u32 [#allocation8], 4
          %s334 = int_to_ptr.vmem [resolvable:$true] %s333
          %339 = dma.hbm_to_vmem [thread:$0]  %s332, 256, %s334, [#allocation9], 64, 64, 4
        $region32: #{tpu_custom_call.1} parent=11 // pred_fallthru
          _
        // Predicated region
        $region33: #{tpu_custom_call.1} parent=11 // pred_check
          %p340 = pneg %p193
        $region34: #{tpu_custom_call.1} parent=11 // pred_check_branch
          %342 = sbr.rel (%p340) target = $region36
        $region35: #{tpu_custom_call.1} parent=11 // pred_region
          _
        $region36: #{tpu_custom_call.1} parent=11 // pred_fallthru
          _
      $region12: #{tpu_custom_call.1} parent=5 // pred_fallthru
        _
      %p343 = scmp.lt.s32.totalorder %s27, 2
      // Predicated region
      $region37: #{tpu_custom_call.1} parent=5 // pred_check
        %p344 = pneg %p343
      $region38: #{tpu_custom_call.1} parent=5 // pred_check_branch
        %346 = sbr.rel (%p344) target = $region40
      $region39: #{tpu_custom_call.1} parent=5 // pred_region
        // Predicated region
        $region41: #{tpu_custom_call.1} parent=39 // pred_check
          %p347 = pneg %p61
        $region42: #{tpu_custom_call.1} parent=39 // pred_check_branch
          %349 = sbr.rel (%p347) target = $region44
        $region43: #{tpu_custom_call.1} parent=39 // pred_region
          %s350 = sand.u32 %s51, 1
          %s351 = scalar_lea.sflag [#allocation3], %s350
          %s352 = sand.u32 %s51, 1
          %s353 = smul.addr %s352, 4
          %s354 = scalar_lea.vmem [#allocation2], %s353
          %356 = vsyncadd %s351, 0
          %s357 = sadd.s32 %s35, %s34
          %s358 = smul.addr %s357, 4
          %s359 = scalar_lea.hbm %s0, %s358
          %s361 = sshll.u32 %s359, 4
          %s362 = int_to_ptr.hbm [resolvable:$true] %s361
          %s363 = sshll.u32 %s354, 4
          %s364 = int_to_ptr.vmem [resolvable:$true] %s363
          %366 = dma.hbm_to_vmem [thread:$0]  %s362, 64, %s364, %s351
        $region44: #{tpu_custom_call.1} parent=39 // pred_fallthru
          _
      $region40: #{tpu_custom_call.1} parent=5 // pred_fallthru
        _
      %p367 = scmp.le.s32.totalorder 1, %s27
      %p368 = scmp.lt.s32.totalorder %s27, 3
      %p369 = pnand %p367, %p368
      %p370 = pneg %p369
      // Predicated region
      $region45: #{tpu_custom_call.1} parent=5 // pred_check
        _
      $region46: #{tpu_custom_call.1} parent=5 // pred_check_branch
        %372 = sbr.rel (%p369) target = $region48
      $region47: #{tpu_custom_call.1} parent=5 // pred_region
        %s373 = ssub.s32 %s27, 1
        %s374 = sand.u32 %s54, 1
        %s375 = scalar_lea.sflag [#allocation3], %s374
        %s376 = sand.u32 %s54, 1
        %s377 = smul.addr %s376, 4
        %s378 = scalar_lea.vmem [#allocation2], %s377
        // Predicated region
        $region49: #{tpu_custom_call.1} parent=47 // pred_check
          %p379 = pneg %p67
        $region50: #{tpu_custom_call.1} parent=47 // pred_check_branch
          %381 = sbr.rel (%p379) target = $region52
        $region51: #{tpu_custom_call.1} parent=47 // pred_region
          %383 = dma.done %s375, 64
        $region52: #{tpu_custom_call.1} parent=47 // pred_fallthru
          _
        // Predicated region
        $region53: #{tpu_custom_call.1} parent=47 // pred_check
          %p384 = pneg %p88
        $region54: #{tpu_custom_call.1} parent=47 // pred_check_branch
          %386 = sbr.rel (%p384) target = $region56
        $region55: #{tpu_custom_call.1} parent=47 // pred_region
          %388 = dma.done [#allocation6], 256
        $region56: #{tpu_custom_call.1} parent=47 // pred_fallthru
          _
        // Predicated region
        $region57: #{tpu_custom_call.1} parent=47 // pred_check
          %p389 = pneg %p130
        $region58: #{tpu_custom_call.1} parent=47 // pred_check_branch
          %391 = sbr.rel (%p389) target = $region60
        $region59: #{tpu_custom_call.1} parent=47 // pred_region
          %393 = dma.done [#allocation6], 256
        $region60: #{tpu_custom_call.1} parent=47 // pred_fallthru
          _
        // Predicated region
        $region61: #{tpu_custom_call.1} parent=47 // pred_check
          %p394 = pneg %p172
        $region62: #{tpu_custom_call.1} parent=47 // pred_check_branch
          %396 = sbr.rel (%p394) target = $region64
        $region63: #{tpu_custom_call.1} parent=47 // pred_region
          %398 = dma.done [#allocation9], 256
        $region64: #{tpu_custom_call.1} parent=47 // pred_fallthru
          _
        %s399 = sand.u32 %s54, 1
        %s400 = scalar_lea.sflag [#allocation3], %s399
        %s401 = sand.u32 %s54, 1
        %s402 = smul.addr %s401, 4
        %s403 = scalar_lea.vmem [#allocation2], %s402
        %p404 = pneg %p67
        %p405 = pneg %p64
        %p406 = pneg %p88
        %p407 = pneg %p85
        %p408 = pneg %p109
        %p409 = pneg %p106
        %p410 = pneg %p130
        %p411 = pneg %p127
        %p412 = pneg %p151
        %p413 = pneg %p148
        %p414 = pneg %p172
        %p415 = pneg %p169
        %p416 = pneg %p193
        %p417 = pneg %p190
        %p418 = pneg %p221
        %p419 = pneg %p218
        %s420 = sand.u32 %s208, 1
        %s421 = scalar_lea.sflag [#allocation4], %s420
        %s422 = sand.u32 %s208, 1
        %s423 = smul.addr %s422, 16
        %s424 = scalar_lea.vmem [#allocation10], %s423
        %p425 = pneg %p249
        %p426 = pneg %p246
        %s427 = sand.u32 %s32, 1
        %s428 = scalar_lea.sflag [#allocation12], %s427
        %s429 = sand.u32 %s236, 1
        %s430 = smul.addr %s429, 16
        %s431 = scalar_lea.vmem [#allocation11], %s430
        %p432 = pneg %p277
        %p433 = pneg %p274
        %s434 = sand.u32 %s32, 1
        %s435 = scalar_lea.sflag [#allocation12], %s434
        %s436 = sand.u32 %s264, 1
        %s437 = smul.addr %s436, 16
        %s438 = scalar_lea.vmem [#allocation13], %s437
        %v440 = vld [vmem:[%s378] sm:$0xf]
        %v441 = vld [vmem:[#allocation5] sm:$0xf]
        %v442 = vld [vmem:[#allocation5 + $0x4] sm:$0xf]
        %v443 = vld [vmem:[#allocation5 + $0x8] sm:$0xf]
        %v444 = vld [vmem:[#allocation5 + $0xc] sm:$0xf]
        %v445 = vld [vmem:[%s2] sm:$0x1]
        %v447 = vperm.slane %v445, 0
        %v453 = vunpack.c.l.b16 %v441
        %v454 = vunpack.c.l.b16 %v442
        %v455 = vunpack.c.l.b16 %v443
        %v456 = vunpack.c.l.b16 %v444
        %v457 = vpack.c.b16 %v454, %v453
        %v458 = vpack.c.b16 %v456, %v455
        %vm461 = vcmask 261120
        %v463 = vsel %vm461, %v440, 0
        %465 = vmatpush.bf16.msra.mxu0 0
        %466 = vmatpush.bf16.msra.mxu0 0
        %467 = vmatpush.bf16.msra.mxu0 0
        %468 = vmatpush.bf16.msra.mxu0 0
        %469 = vmatpush.bf16.msra.mxu0 0
        %470 = vmatpush.bf16.msra.mxu0 0
        %471 = vmatpush.bf16.msra.mxu0 %v458
        %472 = vmatpush.bf16.msra.mxu0 %v457
        %473 = vmatmul.bf16.gmra.mxu0 %v463
        %v474 = vpop.f32.mrf.mxu0
        %v475 = vadd.f32 %v447, %v474
        %v476 = vpop.f32.mrf.mxu0
        %477 = vdwg.mxu0
        %v478 = vpack.c.bf16 %v475, %v475
        %v479 = vld [vmem:[#allocation7] sm:$0xf]
        %v480 = vld [vmem:[#allocation7 + $0x4] sm:$0xf]
        %v481 = vld [vmem:[#allocation7 + $0x8] sm:$0xf]
        %v482 = vld [vmem:[#allocation7 + $0xc] sm:$0xf]
        %v483 = vld [vmem:[%s4] sm:$0x1]
        %v485 = vperm.slane %v483, 0
        %v491 = vunpack.c.l.b16 %v479
        %v492 = vunpack.c.l.b16 %v480
        %v493 = vunpack.c.l.b16 %v481
        %v494 = vunpack.c.l.b16 %v482
        %v495 = vpack.c.b16 %v492, %v491
        %v496 = vpack.c.b16 %v494, %v493
        %499 = vmatpush.bf16.msra.mxu0 0
        %500 = vmatpush.bf16.msra.mxu0 0
        %501 = vmatpush.bf16.msra.mxu0 0
        %502 = vmatpush.bf16.msra.mxu0 0
        %503 = vmatpush.bf16.msra.mxu0 0
        %504 = vmatpush.bf16.msra.mxu0 0
        %505 = vmatpush.bf16.msra.mxu0 %v496
        %506 = vmatpush.bf16.msra.mxu0 %v495
        %507 = vmatmul.bf16.gmra.mxu0 %v463
        %v508 = vpop.f32.mrf.mxu0
        %v509 = vadd.f32 %v485, %v508
        %v510 = vpop.f32.mrf.mxu0
        %511 = vdwg.mxu0
        %v512 = vpack.c.bf16 %v509, %v509
        %v513 = vld [vmem:[#allocation8] sm:$0xf]
        %v514 = vld [vmem:[#allocation8 + $0x4] sm:$0xf]
        %v515 = vld [vmem:[#allocation8 + $0x8] sm:$0xf]
        %v516 = vld [vmem:[#allocation8 + $0xc] sm:$0xf]
        %v517 = vld [vmem:[%s6] sm:$0x1]
        %v519 = vperm.slane %v517, 0
        %v525 = vunpack.c.l.b16 %v513
        %v526 = vunpack.c.l.b16 %v514
        %v527 = vunpack.c.l.b16 %v515
        %v528 = vunpack.c.l.b16 %v516
        %v529 = vpack.c.b16 %v526, %v525
        %v530 = vpack.c.b16 %v528, %v527
        %533 = vmatpush.bf16.msra.mxu0 0
        %534 = vmatpush.bf16.msra.mxu0 0
        %535 = vmatpush.bf16.msra.mxu0 0
        %536 = vmatpush.bf16.msra.mxu0 0
        %537 = vmatpush.bf16.msra.mxu0 0
        %538 = vmatpush.bf16.msra.mxu0 0
        %539 = vmatpush.bf16.msra.mxu0 %v530
        %540 = vmatpush.bf16.msra.mxu0 %v529
        %541 = vmatmul.bf16.gmra.mxu0 %v463
        %v542 = vpop.f32.mrf.mxu0
        %v543 = vadd.f32 %v519, %v542
        %v544 = vpop.f32.mrf.mxu0
        %545 = vdwg.mxu0
        %v546 = vpack.c.bf16 %v543, %v543
        %vm547 = vcmask 60416
        %548 = vst.msk [vmem:[%s424] sm:$0xf] %vm547, %v478
        %549 = vst.msk [vmem:[%s431] sm:$0xf] %vm547, %v512
        %550 = vst.msk [vmem:[%s438] sm:$0xf] %vm547, %v546
        %552 = vrot.lane.b32.xlu0 %v478, 120
        %v553 = vpop.permute.xlu0 %552
        %s555 = scalar_lea.vmem %s424, 4 [#allocation10]
        %556 = vst.msk [vmem:[%s555] sm:$0xf] %vm547, %v553
        %558 = vrot.lane.b32.xlu0 %v512, 120
        %v559 = vpop.permute.xlu0 %558
        %s561 = scalar_lea.vmem %s431, 4 [#allocation11]
        %562 = vst.msk [vmem:[%s561] sm:$0xf] %vm547, %v559
        %564 = vrot.lane.b32.xlu0 %v546, 120
        %v565 = vpop.permute.xlu0 %564
        %s567 = scalar_lea.vmem %s438, 4 [#allocation13]
        %568 = vst.msk [vmem:[%s567] sm:$0xf] %vm547, %v565
        %569 = vrot.lane.b32.xlu0 %v478, 112
        %v570 = vpop.permute.xlu0 %569
        %s572 = scalar_lea.vmem %s424, 8 [#allocation10]
        %573 = vst.msk [vmem:[%s572] sm:$0xf] %vm547, %v570
        %574 = vrot.lane.b32.xlu0 %v512, 112
        %v575 = vpop.permute.xlu0 %574
        %s577 = scalar_lea.vmem %s431, 8 [#allocation11]
        %578 = vst.msk [vmem:[%s577] sm:$0xf] %vm547, %v575
        %579 = vrot.lane.b32.xlu0 %v546, 112
        %v580 = vpop.permute.xlu0 %579
        %s582 = scalar_lea.vmem %s438, 8 [#allocation13]
        %583 = vst.msk [vmem:[%s582] sm:$0xf] %vm547, %v580
        %584 = vrot.lane.b32.xlu0 %v478, 104
        %v585 = vpop.permute.xlu0 %584
        %s587 = scalar_lea.vmem %s424, 12 [#allocation10]
        %588 = vst.msk [vmem:[%s587] sm:$0xf] %vm547, %v585
        %589 = vrot.lane.b32.xlu0 %v512, 104
        %v590 = vpop.permute.xlu0 %589
        %s592 = scalar_lea.vmem %s431, 12 [#allocation11]
        %593 = vst.msk [vmem:[%s592] sm:$0xf] %vm547, %v590
        %594 = vrot.lane.b32.xlu0 %v546, 104
        %v595 = vpop.permute.xlu0 %594
        %s597 = scalar_lea.vmem %s438, 12 [#allocation13]
        %598 = vst.msk [vmem:[%s597] sm:$0xf] %vm547, %v595
        %s599 = sand.u32 %s208, 1
        %s600 = scalar_lea.sflag [#allocation4], %s599
        %s601 = sand.u32 %s208, 1
        %s602 = smul.addr %s601, 16
        %s603 = scalar_lea.vmem [#allocation10], %s602
        %s604 = sand.u32 %s32, 1
        %s605 = scalar_lea.sflag [#allocation12], %s604
        %s606 = sand.u32 %s236, 1
        %s607 = smul.addr %s606, 16
        %s608 = scalar_lea.vmem [#allocation11], %s607
        %s609 = sand.u32 %s32, 1
        %s610 = scalar_lea.sflag [#allocation12], %s609
        %s611 = sand.u32 %s264, 1
        %s612 = smul.addr %s611, 16
        %s613 = scalar_lea.vmem [#allocation13], %s612
        // Predicated region
        $region65: #{tpu_custom_call.1} parent=47 // pred_check
          %p614 = pneg %p218
        $region66: #{tpu_custom_call.1} parent=47 // pred_check_branch
          %616 = sbr.rel (%p614) target = $region68
        $region67: #{tpu_custom_call.1} parent=47 // pred_region
          %618 = vsyncadd %s600, 0
          %s619 = smul.addr %s36, 4
          %s620 = sadd.s32 %s37, %s619
          %s621 = smul.addr %s620, 4
          %s622 = scalar_lea.hbm %s7, %s621
          %s623 = sshll.u32 %s603, 4
          %s624 = int_to_ptr.vmem [resolvable:$true] %s623
          %s625 = sshll.u32 %s622, 4
          %s626 = int_to_ptr.hbm [resolvable:$true] %s625
          %631 = dma.vmem_to_hbm [thread:$0]  %s624, 256, %s626, %s600, 64, 64, 4
        $region68: #{tpu_custom_call.1} parent=47 // pred_fallthru
          _
        // Predicated region
        $region69: #{tpu_custom_call.1} parent=47 // pred_check
          %p632 = pneg %p246
        $region70: #{tpu_custom_call.1} parent=47 // pred_check_branch
          %634 = sbr.rel (%p632) target = $region72
        $region71: #{tpu_custom_call.1} parent=47 // pred_region
          %636 = vsyncadd %s605, 0
          %s637 = smul.addr %s36, 4
          %s638 = sadd.s32 %s37, %s637
          %s639 = smul.addr %s638, 4
          %s640 = scalar_lea.hbm %s8, %s639
          %s641 = sshll.u32 %s608, 4
          %s642 = int_to_ptr.vmem [resolvable:$true] %s641
          %s643 = sshll.u32 %s640, 4
          %s644 = int_to_ptr.hbm [resolvable:$true] %s643
          %649 = dma.vmem_to_hbm [thread:$0]  %s642, 256, %s644, %s605, 64, 64, 4
        $region72: #{tpu_custom_call.1} parent=47 // pred_fallthru
          _
        // Predicated region
        $region73: #{tpu_custom_call.1} parent=47 // pred_check
          %p650 = pneg %p274
        $region74: #{tpu_custom_call.1} parent=47 // pred_check_branch
          %652 = sbr.rel (%p650) target = $region76
        $region75: #{tpu_custom_call.1} parent=47 // pred_region
          %654 = vsyncadd %s610, 0
          %s655 = smul.addr %s36, 4
          %s656 = sadd.s32 %s37, %s655
          %s657 = smul.addr %s656, 4
          %s658 = scalar_lea.hbm %s9, %s657
          %s659 = sshll.u32 %s613, 4
          %s660 = int_to_ptr.vmem [resolvable:$true] %s659
          %s661 = sshll.u32 %s658, 4
          %s662 = int_to_ptr.hbm [resolvable:$true] %s661
          %667 = dma.vmem_to_hbm [thread:$0]  %s660, 256, %s662, %s610, 64, 64, 4
        $region76: #{tpu_custom_call.1} parent=47 // pred_fallthru
          _
      $region48: #{tpu_custom_call.1} parent=5 // pred_fallthru
        _
      %p668 = scmp.le.s32.totalorder 2, %s27
      // Predicated region
      $region77: #{tpu_custom_call.1} parent=5 // pred_check
        %p669 = pneg %p668
      $region78: #{tpu_custom_call.1} parent=5 // pred_check_branch
        %671 = sbr.rel (%p669) target = $region80
      $region79: #{tpu_custom_call.1} parent=5 // pred_region
        %s672 = ssub.s32 %s27, 2
        // Predicated region
        $region81: #{tpu_custom_call.1} parent=79 // pred_check
          %p673 = pneg %p224
        $region82: #{tpu_custom_call.1} parent=79 // pred_check_branch
          %675 = sbr.rel (%p673) target = $region84
        $region83: #{tpu_custom_call.1} parent=79 // pred_region
          %s676 = sand.u32 %s209, 1
          %s677 = scalar_lea.sflag [#allocation4], %s676
          %s678 = sand.u32 %s209, 1
          %s679 = smul.addr %s678, 16
          %s680 = scalar_lea.vmem [#allocation10], %s679
          %682 = dma.done %s677, 256
        $region84: #{tpu_custom_call.1} parent=79 // pred_fallthru
          _
        // Predicated region
        $region85: #{tpu_custom_call.1} parent=79 // pred_check
          %p683 = pneg %p252
        $region86: #{tpu_custom_call.1} parent=79 // pred_check_branch
          %685 = sbr.rel (%p683) target = $region88
        $region87: #{tpu_custom_call.1} parent=79 // pred_region
          %s686 = sand.u32 %s33, 1
          %s687 = scalar_lea.sflag [#allocation12], %s686
          %s688 = sand.u32 %s237, 1
          %s689 = smul.addr %s688, 16
          %s690 = scalar_lea.vmem [#allocation11], %s689
          %692 = dma.done %s687, 256
        $region88: #{tpu_custom_call.1} parent=79 // pred_fallthru
          _
        // Predicated region
        $region89: #{tpu_custom_call.1} parent=79 // pred_check
          %p693 = pneg %p280
        $region90: #{tpu_custom_call.1} parent=79 // pred_check_branch
          %695 = sbr.rel (%p693) target = $region92
        $region91: #{tpu_custom_call.1} parent=79 // pred_region
          %s696 = sand.u32 %s33, 1
          %s697 = scalar_lea.sflag [#allocation12], %s696
          %s698 = sand.u32 %s265, 1
          %s699 = smul.addr %s698, 16
          %s700 = scalar_lea.vmem [#allocation13], %s699
          %702 = dma.done %s697, 256
        $region92: #{tpu_custom_call.1} parent=79 // pred_fallthru
          _
      $region80: #{tpu_custom_call.1} parent=5 // pred_fallthru
        _
    $region6: #{tpu_custom_call.1} parent=1 // loop_footer
      %s31 = sadd.s32 1, %s27
    $region7: #{tpu_custom_call.1} parent=1 // loop_footer_branch
      %26 = sbr.rel target = $region3
    $region8: #{tpu_custom_call.1} parent=1 // loop_exit
      _
    %703 = vsyncpa [#allocation3], 1
    %s704 = scalar_lea.sflag [#allocation3], 1
    %705 = vsyncpa %s704, 1
    %706 = vsyncpa [#allocation6], 1
    %707 = vsyncpa [#allocation9], 1
    %708 = vsyncpa [#allocation4], 1
    %s709 = scalar_lea.sflag [#allocation4], 1
    %710 = vsyncpa %s709, 1
    %711 = vsyncpa [#allocation12], 1
    %s712 = scalar_lea.sflag [#allocation12], 1
    %713 = vsyncpa %s712, 1

// kernel: tpu_custom_call.1
$region0: #{tpu_custom_call.1}
  #allocation0 [shape = 'u32[]', space=smem, size = 0x4, offset = 0x4, fixed_abs, tag = 'smem constant byte address 0x4 - core index']
  #allocation1 [shape = 'u32[72,128]{1,0:T(1,128)}', space=vmem, size = 0x9000, scoped, tag = 'internal scratch']
  %s0 = inlined_call_operand.hbm [shape: bf16[2,8,32], index: 0, kind: input, shape index: {}]
  %s1 = inlined_call_operand.hbm [shape: bf16[32,32], index: 1, kind: input, shape index: {}]
  %s2 = inlined_call_operand.vmem [shape: f32[1,32], index: 2, kind: input, shape index: {}]
  %s3 = inlined_call_operand.hbm [shape: bf16[32,32], index: 3, kind: input, shape index: {}]
  %s4 = inlined_call_operand.vmem [shape: f32[1,32], index: 4, kind: input, shape index: {}]
  %s5 = inlined_call_operand.hbm [shape: bf16[32,32], index: 5, kind: input, shape index: {}]
  %s6 = inlined_call_operand.vmem [shape: f32[1,32], index: 6, kind: input, shape index: {}]
  %s7 = inlined_call_operand.hbm [shape: bf16[2,4,8,8], index: 7, kind: output, shape index: {0}]
  %s8 = inlined_call_operand.hbm [shape: bf16[2,4,8,8], index: 8, kind: output, shape index: {1}]
  %s9 = inlined_call_operand.hbm [shape: bf16[2,4,8,8], index: 9, kind: output, shape index: {2}]
  %10 = xla_tuple %s7, %s8, %s9
  %s11 = sld [smem:[#allocation0]]
  $region93: #{tpu_custom_call.1} parent=0
    _
  %s13 = ssub.s32 1, %s11
  %s14 = scalar_select 0, %s13, %s11
  $region1: #{tpu_custom_call.1} parent=0
    #allocation2 [shape = 'u8[4096]{0}', space=vmem, size = 0x1000, scoped, tag = 'input window, operand 0']
    #allocation3 [shape = 's32[2]{0}', space=sflag, size = 0x8, scoped, tag = 'scoped memory for tpu_custom_call.1']
    #allocation4 [shape = 's32[2]{0}', space=sflag, size = 0x8, scoped, tag = 'scoped memory for tpu_custom_call.1']
    #allocation5 [shape = 'u8[8192]{0}', space=vmem, size = 0x2000, scoped, tag = 'input window, operand 1, single buffered']
    #allocation6 [shape = 's32[1]{0}', space=sflag, size = 0x4, scoped, tag = 'scoped memory for tpu_custom_call.1']
    #allocation7 [shape = 'u8[8192]{0}', space=vmem, size = 0x2000, scoped, tag = 'input window, operand 3, single buffered']
    #allocation8 [shape = 'u8[8192]{0}', space=vmem, size = 0x2000, scoped, tag = 'input window, operand 5, single buffered']
    #allocation9 [shape = 's32[1]{0}', space=sflag, size = 0x4, scoped, tag = 'scoped memory for tpu_custom_call.1']
    #allocation10 [shape = 'u8[16384]{0}', space=vmem, size = 0x4000, scoped, tag = 'output window, operand 0']
    #allocation11 [shape = 'u8[16384]{0}', space=vmem, size = 0x4000, scoped, tag = 'output window, operand 1']
    #allocation12 [shape = 's32[2]{0}', space=sflag, size = 0x8, scoped, tag = 'scoped memory for tpu_custom_call.1']
    #allocation13 [shape = 'u8[16384]{0}', space=vmem, size = 0x4000, scoped, tag = 'output window, operand 2']
    %15 = vsyncpa [#allocation3], 0
    %s16 = scalar_lea.sflag [#allocation3], 1
    %17 = vsyncpa %s16, 0
    %18 = vsyncpa [#allocation6], 0
    %19 = vsyncpa [#allocation9], 0
    %20 = vsyncpa [#allocation4], 0
    %s21 = scalar_lea.sflag [#allocation4], 1
    %22 = vsyncpa %s21, 0
    %23 = vsyncpa [#allocation12], 0
    %s24 = scalar_lea.sflag [#allocation12], 1
    %25 = vsyncpa %s24, 0
    loop: start=0, step=1, limit=4
    $region2: #{tpu_custom_call.1} parent=1 // loop_pre_header
      _
    $region3: #{tpu_custom_call.1} parent=1 // loop_header
      %s27 = sphi 0, %s31
      %p28 = scmp.ge.s32.totalorder %s27, 4
      %s34 = sphi 0, %s46
      %s35 = sphi 0, %s42
      %s36 = sphi 0, %s34
      %s37 = sphi 0, %s35
      %s38 = sphi 0, %s36
      %s39 = sphi 0, %s37
      %s51 = sphi 0, %s53
      %s54 = sphi 0, %s51
      %s55 = sphi 0, %s54
      %s71 = sphi 0, %s55
      %s75 = sphi 0, %s75
      %s77 = sphi 0, %s75
      %s78 = sphi 0, %s77
      %s92 = sphi 0, %s78
      %s96 = sphi 0, %s96
      %s98 = sphi 0, %s96
      %s99 = sphi 0, %s98
      %s113 = sphi 0, %s99
      %s117 = sphi 0, %s117
      %s119 = sphi 0, %s117
      %s120 = sphi 0, %s119
      %s134 = sphi 0, %s120
      %s138 = sphi 0, %s138
      %s140 = sphi 0, %s138
      %s141 = sphi 0, %s140
      %s155 = sphi 0, %s141
      %s159 = sphi 0, %s159
      %s161 = sphi 0, %s159
      %s162 = sphi 0, %s161
      %s176 = sphi 0, %s162
      %s180 = sphi 0, %s180
      %s182 = sphi 0, %s180
      %s183 = sphi 0, %s182
      %s197 = sphi 0, %s183
      %s205 = sphi 0, %s207
      %s208 = sphi 0, %s205
      %s209 = sphi 0, %s208
      %s225 = sphi 0, %s209
      %s233 = sphi 0, %s235
      %s236 = sphi 0, %s233
      %s237 = sphi 0, %s236
      %s253 = sphi 0, %s237
      %s261 = sphi 0, %s263
      %s264 = sphi 0, %s261
      %s265 = sphi 0, %s264
      %s281 = sphi 0, %s265
    $region4: #{tpu_custom_call.1} parent=1 // loop_header_branch
      %30 = sbr.rel (%p28) target = $region8
    $region5: #{tpu_custom_call.1} parent=1 // loop_body
      %s32 = ssub.s32 %s27, 1
      %s33 = ssub.s32 %s27, 2
      %s40 = sadd.s32 1, %s35
      %p41 = scmp.ge.s32.totalorder %s40, 1
      %s42 = scalar_select %p41, 0, %s40
      %s43 = sadd.s32 1, %s34
      %s44 = scalar_select %p41, %s43, %s34
      %p45 = scmp.ge.s32.totalorder %s44, 2
      %s46 = scalar_select %p45, 0, %s44
      %s47 = ssub.s32 %s34, %s46
      %s48 = ssub.s32 %s35, %s42
      %s49 = sor.u32 %s47, %s48
      %p50 = scmp.eq.s32.totalorder %s49, 0
      %s52 = sadd.s32 %s51, 1
      %s53 = scalar_select %p50, %s51, %s52
      %p56 = pneg %p50
      %p57 = scmp.eq.s32.totalorder %s27, 1
      %p58 = por %p56, %p57
      %p59 = scmp.ne.s32.totalorder %s51, %s54
      %p60 = scmp.eq.s32.totalorder %s27, 0
      %p61 = por %p59, %p60
      %p62 = scmp.ne.s32.totalorder %s51, %s54
      %p63 = scmp.eq.s32.totalorder %s32, 1
      %p64 = por %p62, %p63
      %p65 = scmp.ne.s32.totalorder %s54, %s55
      %p66 = scmp.eq.s32.totalorder %s32, 0
      %p67 = por %p65, %p66
      %p68 = scmp.ne.s32.totalorder %s54, %s55
      %p69 = scmp.eq.s32.totalorder %s33, 1
      %p70 = por %p68, %p69
      %p72 = scmp.ne.s32.totalorder %s55, %s71
      %p73 = scmp.eq.s32.totalorder %s33, 0
      %p74 = por %p72, %p73
      %s76 = sadd.s32 %s75, 1
      %p79 = scmp.eq.s32.totalorder %s27, 1
      %p80 = scmp.ne.s32.totalorder %s75, %s77
      %p81 = scmp.eq.s32.totalorder %s27, 0
      %p82 = por %p80, %p81
      %p83 = scmp.ne.s32.totalorder %s75, %s77
      %p84 = scmp.eq.s32.totalorder %s32, 1
      %p85 = por %p83, %p84
      %p86 = scmp.ne.s32.totalorder %s77, %s78
      %p87 = scmp.eq.s32.totalorder %s32, 0
      %p88 = por %p86, %p87
      %p89 = scmp.ne.s32.totalorder %s77, %s78
      %p90 = scmp.eq.s32.totalorder %s33, 1
      %p91 = por %p89, %p90
      %p93 = scmp.ne.s32.totalorder %s78, %s92
      %p94 = scmp.eq.s32.totalorder %s33, 0
      %p95 = por %p93, %p94
      %s97 = sadd.s32 %s96, 1
      %p100 = scmp.eq.s32.totalorder %s27, 1
      %p101 = scmp.ne.s32.totalorder %s96, %s98
      %p102 = scmp.eq.s32.totalorder %s27, 0
      %p103 = por %p101, %p102
      %p104 = scmp.ne.s32.totalorder %s96, %s98
      %p105 = scmp.eq.s32.totalorder %s32, 1
      %p106 = por %p104, %p105
      %p107 = scmp.ne.s32.totalorder %s98, %s99
      %p108 = scmp.eq.s32.totalorder %s32, 0
      %p109 = por %p107, %p108
      %p110 = scmp.ne.s32.totalorder %s98, %s99
      %p111 = scmp.eq.s32.totalorder %s33, 1
      %p112 = por %p110, %p111
      %p114 = scmp.ne.s32.totalorder %s99, %s113
      %p115 = scmp.eq.s32.totalorder %s33, 0
      %p116 = por %p114, %p115
      %s118 = sadd.s32 %s117, 1
      %p121 = scmp.eq.s32.totalorder %s27, 1
      %p122 = scmp.ne.s32.totalorder %s117, %s119
      %p123 = scmp.eq.s32.totalorder %s27, 0
      %p124 = por %p122, %p123
      %p125 = scmp.ne.s32.totalorder %s117, %s119
      %p126 = scmp.eq.s32.totalorder %s32, 1
      %p127 = por %p125, %p126
      %p128 = scmp.ne.s32.totalorder %s119, %s120
      %p129 = scmp.eq.s32.totalorder %s32, 0
      %p130 = por %p128, %p129
      %p131 = scmp.ne.s32.totalorder %s119, %s120
      %p132 = scmp.eq.s32.totalorder %s33, 1
      %p133 = por %p131, %p132
      %p135 = scmp.ne.s32.totalorder %s120, %s134
      %p136 = scmp.eq.s32.totalorder %s33, 0
      %p137 = por %p135, %p136
      %s139 = sadd.s32 %s138, 1
      %p142 = scmp.eq.s32.totalorder %s27, 1
      %p143 = scmp.ne.s32.totalorder %s138, %s140
      %p144 = scmp.eq.s32.totalorder %s27, 0
      %p145 = por %p143, %p144
      %p146 = scmp.ne.s32.totalorder %s138, %s140
      %p147 = scmp.eq.s32.totalorder %s32, 1
      %p148 = por %p146, %p147
      %p149 = scmp.ne.s32.totalorder %s140, %s141
      %p150 = scmp.eq.s32.totalorder %s32, 0
      %p151 = por %p149, %p150
      %p152 = scmp.ne.s32.totalorder %s140, %s141
      %p153 = scmp.eq.s32.totalorder %s33, 1
      %p154 = por %p152, %p153
      %p156 = scmp.ne.s32.totalorder %s141, %s155
      %p157 = scmp.eq.s32.totalorder %s33, 0
      %p158 = por %p156, %p157
      %s160 = sadd.s32 %s159, 1
      %p163 = scmp.eq.s32.totalorder %s27, 1
      %p164 = scmp.ne.s32.totalorder %s159, %s161
      %p165 = scmp.eq.s32.totalorder %s27, 0
      %p166 = por %p164, %p165
      %p167 = scmp.ne.s32.totalorder %s159, %s161
      %p168 = scmp.eq.s32.totalorder %s32, 1
      %p169 = por %p167, %p168
      %p170 = scmp.ne.s32.totalorder %s161, %s162
      %p171 = scmp.eq.s32.totalorder %s32, 0
      %p172 = por %p170, %p171
      %p173 = scmp.ne.s32.totalorder %s161, %s162
      %p174 = scmp.eq.s32.totalorder %s33, 1
      %p175 = por %p173, %p174
      %p177 = scmp.ne.s32.totalorder %s162, %s176
      %p178 = scmp.eq.s32.totalorder %s33, 0
      %p179 = por %p177, %p178
      %s181 = sadd.s32 %s180, 1
      %p184 = scmp.eq.s32.totalorder %s27, 1
      %p185 = scmp.ne.s32.totalorder %s180, %s182
      %p186 = scmp.eq.s32.totalorder %s27, 0
      %p187 = por %p185, %p186
      %p188 = scmp.ne.s32.totalorder %s180, %s182
      %p189 = scmp.eq.s32.totalorder %s32, 1
      %p190 = por %p188, %p189
      %p191 = scmp.ne.s32.totalorder %s182, %s183
      %p192 = scmp.eq.s32.totalorder %s32, 0
      %p193 = por %p191, %p192
      %p194 = scmp.ne.s32.totalorder %s182, %s183
      %p195 = scmp.eq.s32.totalorder %s33, 1
      %p196 = por %p194, %p195
      %p198 = scmp.ne.s32.totalorder %s183, %s197
      %p199 = scmp.eq.s32.totalorder %s33, 0
      %p200 = por %p198, %p199
      %s201 = ssub.s32 %s34, %s46
      %s202 = ssub.s32 %s35, %s42
      %s203 = sor.u32 %s201, %s202
      %p204 = scmp.eq.s32.totalorder %s203, 0
      %s206 = sadd.s32 %s205, 1
      %s207 = scalar_select %p204, %s205, %s206
      %p210 = pneg %p204
      %p211 = scmp.eq.s32.totalorder %s27, 1
      %p212 = por %p210, %p211
      %p213 = scmp.ne.s32.totalorder %s205, %s208
      %p214 = scmp.eq.s32.totalorder %s27, 0
      %p215 = por %p213, %p214
      %p216 = scmp.ne.s32.totalorder %s205, %s208
      %p217 = scmp.eq.s32.totalorder %s32, 1
      %p218 = por %p216, %p217
      %p219 = scmp.ne.s32.totalorder %s208, %s209
      %p220 = scmp.eq.s32.totalorder %s32, 0
      %p221 = por %p219, %p220
      %p222 = scmp.ne.s32.totalorder %s208, %s209
      %p223 = scmp.eq.s32.totalorder %s33, 1
      %p224 = por %p222, %p223
      %p226 = scmp.ne.s32.totalorder %s209, %s225
      %p227 = scmp.eq.s32.totalorder %s33, 0
      %p228 = por %p226, %p227
      %s229 = ssub.s32 %s34, %s46
      %s230 = ssub.s32 %s35, %s42
      %s231 = sor.u32 %s229, %s230
      %p232 = scmp.eq.s32.totalorder %s231, 0
      %s234 = sadd.s32 %s233, 1
      %s235 = scalar_select %p232, %s233, %s234
      %p238 = pneg %p232
      %p239 = scmp.eq.s32.totalorder %s27, 1
      %p240 = por %p238, %p239
      %p241 = scmp.ne.s32.totalorder %s233, %s236
      %p242 = scmp.eq.s32.totalorder %s27, 0
      %p243 = por %p241, %p242
      %p244 = scmp.ne.s32.totalorder %s233, %s236
      %p245 = scmp.eq.s32.totalorder %s32, 1
      %p246 = por %p244, %p245
      %p247 = scmp.ne.s32.totalorder %s236, %s237
      %p248 = scmp.eq.s32.totalorder %s32, 0
      %p249 = por %p247, %p248
      %p250 = scmp.ne.s32.totalorder %s236, %s237
      %p251 = scmp.eq.s32.totalorder %s33, 1
      %p252 = por %p250, %p251
      %p254 = scmp.ne.s32.totalorder %s237, %s253
      %p255 = scmp.eq.s32.totalorder %s33, 0
      %p256 = por %p254, %p255
      %s257 = ssub.s32 %s34, %s46
      %s258 = ssub.s32 %s35, %s42
      %s259 = sor.u32 %s257, %s258
      %p260 = scmp.eq.s32.totalorder %s259, 0
      %s262 = sadd.s32 %s261, 1
      %s263 = scalar_select %p260, %s261, %s262
      %p266 = pneg %p260
      %p267 = scmp.eq.s32.totalorder %s27, 1
      %p268 = por %p266, %p267
      %p269 = scmp.ne.s32.totalorder %s261, %s264
      %p270 = scmp.eq.s32.totalorder %s27, 0
      %p271 = por %p269, %p270
      %p272 = scmp.ne.s32.totalorder %s261, %s264
      %p273 = scmp.eq.s32.totalorder %s32, 1
      %p274 = por %p272, %p273
      %p275 = scmp.ne.s32.totalorder %s264, %s265
      %p276 = scmp.eq.s32.totalorder %s32, 0
      %p277 = por %p275, %p276
      %p278 = scmp.ne.s32.totalorder %s264, %s265
      %p279 = scmp.eq.s32.totalorder %s33, 1
      %p280 = por %p278, %p279
      %p282 = scmp.ne.s32.totalorder %s265, %s281
      %p283 = scmp.eq.s32.totalorder %s33, 0
      %p284 = por %p282, %p283
      %p285 = scmp.le.s32.totalorder 1, %s27
      %p286 = scmp.lt.s32.totalorder %s27, 3
      %p287 = pnand %p285, %p286
      %p288 = pneg %p287
      // Predicated region
      $region9: #{tpu_custom_call.1} parent=5 // pred_check
        _
      $region10: #{tpu_custom_call.1} parent=5 // pred_check_branch
        %290 = sbr.rel (%p287) target = $region12
      $region11: #{tpu_custom_call.1} parent=5 // pred_region
        %s291 = ssub.s32 %s27, 1
        // Predicated region
        $region13: #{tpu_custom_call.1} parent=11 // pred_check
          %p292 = pneg %p88
        $region14: #{tpu_custom_call.1} parent=11 // pred_check_branch
          %294 = sbr.rel (%p292) target = $region16
        $region15: #{tpu_custom_call.1} parent=11 // pred_region
          %296 = vsyncadd [#allocation6], 0
          %s297 = sshll.u32 %s1, 4
          %s298 = int_to_ptr.hbm [resolvable:$true] %s297
          %s299 = sshll.u32 [#allocation5], 4
          %s300 = int_to_ptr.vmem [resolvable:$true] %s299
          %305 = dma.hbm_to_vmem [thread:$0]  %s298, 256, %s300, [#allocation6], 64, 64, 4
        $region16: #{tpu_custom_call.1} parent=11 // pred_fallthru
          _
        // Predicated region
        $region17: #{tpu_custom_call.1} parent=11 // pred_check
          %p306 = pneg %p109
        $region18: #{tpu_custom_call.1} parent=11 // pred_check_branch
          %308 = sbr.rel (%p306) target = $region20
        $region19: #{tpu_custom_call.1} parent=11 // pred_region
          _
        $region20: #{tpu_custom_call.1} parent=11 // pred_fallthru
          _
        // Predicated region
        $region21: #{tpu_custom_call.1} parent=11 // pred_check
          %p309 = pneg %p130
        $region22: #{tpu_custom_call.1} parent=11 // pred_check_branch
          %311 = sbr.rel (%p309) target = $region24
        $region23: #{tpu_custom_call.1} parent=11 // pred_region
          %313 = vsyncadd [#allocation6], 0
          %s314 = sshll.u32 %s3, 4
          %s315 = int_to_ptr.hbm [resolvable:$true] %s314
          %s316 = sshll.u32 [#allocation7], 4
          %s317 = int_to_ptr.vmem [resolvable:$true] %s316
          %322 = dma.hbm_to_vmem [thread:$0]  %s315, 256, %s317, [#allocation6], 64, 64, 4
        $region24: #{tpu_custom_call.1} parent=11 // pred_fallthru
          _
        // Predicated region
        $region25: #{tpu_custom_call.1} parent=11 // pred_check
          %p323 = pneg %p151
        $region26: #{tpu_custom_call.1} parent=11 // pred_check_branch
          %325 = sbr.rel (%p323) target = $region28
        $region27: #{tpu_custom_call.1} parent=11 // pred_region
          _
        $region28: #{tpu_custom_call.1} parent=11 // pred_fallthru
          _
        // Predicated region
        $region29: #{tpu_custom_call.1} parent=11 // pred_check
          %p326 = pneg %p172
        $region30: #{tpu_custom_call.1} parent=11 // pred_check_branch
          %328 = sbr.rel (%p326) target = $region32
        $region31: #{tpu_custom_call.1} parent=11 // pred_region
          %330 = vsyncadd [#allocation9], 0
          %s331 = sshll.u32 %s5, 4
          %s332 = int_to_ptr.hbm [resolvable:$true] %s331
          %s333 = sshll.u32 [#allocation8], 4
          %s334 = int_to_ptr.vmem [resolvable:$true] %s333
          %339 = dma.hbm_to_vmem [thread:$0]  %s332, 256, %s334, [#allocation9], 64, 64, 4
        $region32: #{tpu_custom_call.1} parent=11 // pred_fallthru
          _
        // Predicated region
        $region33: #{tpu_custom_call.1} parent=11 // pred_check
          %p340 = pneg %p193
        $region34: #{tpu_custom_call.1} parent=11 // pred_check_branch
          %342 = sbr.rel (%p340) target = $region36
        $region35: #{tpu_custom_call.1} parent=11 // pred_region
          _
        $region36: #{tpu_custom_call.1} parent=11 // pred_fallthru
          _
      $region12: #{tpu_custom_call.1} parent=5 // pred_fallthru
        _
      %p343 = scmp.lt.s32.totalorder %s27, 2
      // Predicated region
      $region37: #{tpu_custom_call.1} parent=5 // pred_check
        %p344 = pneg %p343
      $region38: #{tpu_custom_call.1} parent=5 // pred_check_branch
        %346 = sbr.rel (%p344) target = $region40
      $region39: #{tpu_custom_call.1} parent=5 // pred_region
        // Predicated region
        $region41: #{tpu_custom_call.1} parent=39 // pred_check
          %p347 = pneg %p61
        $region42: #{tpu_custom_call.1} parent=39 // pred_check_branch
          %349 = sbr.rel (%p347) target = $region44
        $region43: #{tpu_custom_call.1} parent=39 // pred_region
          %s350 = sand.u32 %s51, 1
          %s351 = scalar_lea.sflag [#allocation3], %s350
          %s352 = sand.u32 %s51, 1
          %s353 = smul.addr %s352, 4
          %s354 = scalar_lea.vmem [#allocation2], %s353
          %356 = vsyncadd %s351, 0
          %s357 = sadd.s32 %s35, %s34
          %s358 = smul.addr %s357, 4
          %s359 = scalar_lea.hbm %s0, %s358
          %s361 = sshll.u32 %s359, 4
          %s362 = int_to_ptr.hbm [resolvable:$true] %s361
          %s363 = sshll.u32 %s354, 4
          %s364 = int_to_ptr.vmem [resolvable:$true] %s363
          %366 = dma.hbm_to_vmem [thread:$0]  %s362, 64, %s364, %s351
        $region44: #{tpu_custom_call.1} parent=39 // pred_fallthru
          _
      $region40: #{tpu_custom_call.1} parent=5 // pred_fallthru
        _
      %p367 = scmp.le.s32.totalorder 1, %s27
      %p368 = scmp.lt.s32.totalorder %s27, 3
      %p369 = pnand %p367, %p368
      %p370 = pneg %p369
      // Predicated region
      $region45: #{tpu_custom_call.1} parent=5 // pred_check
        _
      $region46: #{tpu_custom_call.1} parent=5 // pred_check_branch
        %372 = sbr.rel (%p369) target = $region48
      $region47: #{tpu_custom_call.1} parent=5 // pred_region
        %s373 = ssub.s32 %s27, 1
        %s374 = sand.u32 %s54, 1
        %s375 = scalar_lea.sflag [#allocation3], %s374
        %s376 = sand.u32 %s54, 1
        %s377 = smul.addr %s376, 4
        %s378 = scalar_lea.vmem [#allocation2], %s377
        // Predicated region
        $region49: #{tpu_custom_call.1} parent=47 // pred_check
          %p379 = pneg %p67
        $region50: #{tpu_custom_call.1} parent=47 // pred_check_branch
          %381 = sbr.rel (%p379) target = $region52
        $region51: #{tpu_custom_call.1} parent=47 // pred_region
          %383 = dma.done %s375, 64
        $region52: #{tpu_custom_call.1} parent=47 // pred_fallthru
          _
        // Predicated region
        $region53: #{tpu_custom_call.1} parent=47 // pred_check
          %p384 = pneg %p88
        $region54: #{tpu_custom_call.1} parent=47 // pred_check_branch
          %386 = sbr.rel (%p384) target = $region56
        $region55: #{tpu_custom_call.1} parent=47 // pred_region
          %388 = dma.done [#allocation6], 256
        $region56: #{tpu_custom_call.1} parent=47 // pred_fallthru
          _
        // Predicated region
        $region57: #{tpu_custom_call.1} parent=47 // pred_check
          %p389 = pneg %p130
        $region58: #{tpu_custom_call.1} parent=47 // pred_check_branch
          %391 = sbr.rel (%p389) target = $region60
        $region59: #{tpu_custom_call.1} parent=47 // pred_region
          %393 = dma.done [#allocation6], 256
        $region60: #{tpu_custom_call.1} parent=47 // pred_fallthru
          _
        // Predicated region
        $region61: #{tpu_custom_call.1} parent=47 // pred_check
          %p394 = pneg %p172
        $region62: #{tpu_custom_call.1} parent=47 // pred_check_branch
          %396 = sbr.rel (%p394) target = $region64
        $region63: #{tpu_custom_call.1} parent=47 // pred_region
          %398 = dma.done [#allocation9], 256
        $region64: #{tpu_custom_call.1} parent=47 // pred_fallthru
          _
        %s399 = sand.u32 %s54, 1
        %s400 = scalar_lea.sflag [#allocation3], %s399
        %s401 = sand.u32 %s54, 1
        %s402 = smul.addr %s401, 4
        %s403 = scalar_lea.vmem [#allocation2], %s402
        %p404 = pneg %p67
        %p405 = pneg %p64
        %p406 = pneg %p88
        %p407 = pneg %p85
        %p408 = pneg %p109
        %p409 = pneg %p106
        %p410 = pneg %p130
        %p411 = pneg %p127
        %p412 = pneg %p151
        %p413 = pneg %p148
        %p414 = pneg %p172
        %p415 = pneg %p169
        %p416 = pneg %p193
        %p417 = pneg %p190
        %p418 = pneg %p221
        %p419 = pneg %p218
        %s420 = sand.u32 %s208, 1
        %s421 = scalar_lea.sflag [#allocation4], %s420
        %s422 = sand.u32 %s208, 1
        %s423 = smul.addr %s422, 16
        %s424 = scalar_lea.vmem [#allocation10], %s423
        %p425 = pneg %p249
        %p426 = pneg %p246
        %s427 = sand.u32 %s32, 1
        %s428 = scalar_lea.sflag [#allocation12], %s427
        %s429 = sand.u32 %s236, 1
        %s430 = smul.addr %s429, 16
        %s431 = scalar_lea.vmem [#allocation11], %s430
        %p432 = pneg %p277
        %p433 = pneg %p274
        %s434 = sand.u32 %s32, 1
        %s435 = scalar_lea.sflag [#allocation12], %s434
        %s436 = sand.u32 %s264, 1
        %s437 = smul.addr %s436, 16
        %s438 = scalar_lea.vmem [#allocation13], %s437
        %v440 = vld [vmem:[%s378] sm:$0xf]
        %v441 = vld [vmem:[#allocation5] sm:$0xf]
        %v442 = vld [vmem:[#allocation5 + $0x4] sm:$0xf]
        %v443 = vld [vmem:[#allocation5 + $0x8] sm:$0xf]
        %v444 = vld [vmem:[#allocation5 + $0xc] sm:$0xf]
        %v445 = vld [vmem:[%s2] sm:$0x1]
        %v447 = vperm.slane %v445, 0
        %v453 = vunpack.c.l.b16 %v441
        %v454 = vunpack.c.l.b16 %v442
        %v455 = vunpack.c.l.b16 %v443
        %v456 = vunpack.c.l.b16 %v444
        %v457 = vpack.c.b16 %v454, %v453
        %v458 = vpack.c.b16 %v456, %v455
        %vm461 = vcmask 261120
        %v463 = vsel %vm461, %v440, 0
        %465 = vmatpush.bf16.msra.mxu0 0
        %466 = vmatpush.bf16.msra.mxu0 0
        %467 = vmatpush.bf16.msra.mxu0 0
        %468 = vmatpush.bf16.msra.mxu0 0
        %469 = vmatpush.bf16.msra.mxu0 0
        %470 = vmatpush.bf16.msra.mxu0 0
        %471 = vmatpush.bf16.msra.mxu0 %v458
        %472 = vmatpush.bf16.msra.mxu0 %v457
        %473 = vmatmul.bf16.gmra.mxu0 %v463
        %v474 = vpop.f32.mrf.mxu0
        %v475 = vadd.f32 %v447, %v474
        %v476 = vpop.f32.mrf.mxu0
        %477 = vdwg.mxu0
        %v478 = vpack.c.bf16 %v475, %v475
        %v479 = vld [vmem:[#allocation7] sm:$0xf]
        %v480 = vld [vmem:[#allocation7 + $0x4] sm:$0xf]
        %v481 = vld [vmem:[#allocation7 + $0x8] sm:$0xf]
        %v482 = vld [vmem:[#allocation7 + $0xc] sm:$0xf]
        %v483 = vld [vmem:[%s4] sm:$0x1]
        %v485 = vperm.slane %v483, 0
        %v491 = vunpack.c.l.b16 %v479
        %v492 = vunpack.c.l.b16 %v480
        %v493 = vunpack.c.l.b16 %v481
        %v494 = vunpack.c.l.b16 %v482
        %v495 = vpack.c.b16 %v492, %v491
        %v496 = vpack.c.b16 %v494, %v493
        %499 = vmatpush.bf16.msra.mxu0 0
        %500 = vmatpush.bf16.msra.mxu0 0
        %501 = vmatpush.bf16.msra.mxu0 0
        %502 = vmatpush.bf16.msra.mxu0 0
        %503 = vmatpush.bf16.msra.mxu0 0
        %504 = vmatpush.bf16.msra.mxu0 0
        %505 = vmatpush.bf16.msra.mxu0 %v496
        %506 = vmatpush.bf16.msra.mxu0 %v495
        %507 = vmatmul.bf16.gmra.mxu0 %v463
        %v508 = vpop.f32.mrf.mxu0
        %v509 = vadd.f32 %v485, %v508
        %v510 = vpop.f32.mrf.mxu0
        %511 = vdwg.mxu0
        %v512 = vpack.c.bf16 %v509, %v509
        %v513 = vld [vmem:[#allocation8] sm:$0xf]
        %v514 = vld [vmem:[#allocation8 + $0x4] sm:$0xf]
        %v515 = vld [vmem:[#allocation8 + $0x8] sm:$0xf]
        %v516 = vld [vmem:[#allocation8 + $0xc] sm:$0xf]
        %v517 = vld [vmem:[%s6] sm:$0x1]
        %v519 = vperm.slane %v517, 0
        %v525 = vunpack.c.l.b16 %v513
        %v526 = vunpack.c.l.b16 %v514
        %v527 = vunpack.c.l.b16 %v515
        %v528 = vunpack.c.l.b16 %v516
        %v529 = vpack.c.b16 %v526, %v525
        %v530 = vpack.c.b16 %v528, %v527
        %533 = vmatpush.bf16.msra.mxu0 0
        %534 = vmatpush.bf16.msra.mxu0 0
        %535 = vmatpush.bf16.msra.mxu0 0
        %536 = vmatpush.bf16.msra.mxu0 0
        %537 = vmatpush.bf16.msra.mxu0 0
        %538 = vmatpush.bf16.msra.mxu0 0
        %539 = vmatpush.bf16.msra.mxu0 %v530
        %540 = vmatpush.bf16.msra.mxu0 %v529
        %541 = vmatmul.bf16.gmra.mxu0 %v463
        %v542 = vpop.f32.mrf.mxu0
        %v543 = vadd.f32 %v519, %v542
        %v544 = vpop.f32.mrf.mxu0
        %545 = vdwg.mxu0
        %v546 = vpack.c.bf16 %v543, %v543
        %vm547 = vcmask 60416
        %548 = vst.msk [vmem:[%s424] sm:$0xf] %vm547, %v478
        %549 = vst.msk [vmem:[%s431] sm:$0xf] %vm547, %v512
        %550 = vst.msk [vmem:[%s438] sm:$0xf] %vm547, %v546
        %552 = vrot.lane.b32.xlu0 %v478, 120
        %v553 = vpop.permute.xlu0 %552
        %s555 = scalar_lea.vmem %s424, 4 [#allocation10]
        %556 = vst.msk [vmem:[%s555] sm:$0xf] %vm547, %v553
        %558 = vrot.lane.b32.xlu0 %v512, 120
        %v559 = vpop.permute.xlu0 %558
        %s561 = scalar_lea.vmem %s431, 4 [#allocation11]
        %562 = vst.msk [vmem:[%s561] sm:$0xf] %vm547, %v559
        %564 = vrot.lane.b32.xlu0 %v546, 120
        %v565 = vpop.permute.xlu0 %564
        %s567 = scalar_lea.vmem %s438, 4 [#allocation13]
        %568 = vst.msk [vmem:[%s567] sm:$0xf] %vm547, %v565
        %569 = vrot.lane.b32.xlu0 %v478, 112
        %v570 = vpop.permute.xlu0 %569
        %s572 = scalar_lea.vmem %s424, 8 [#allocation10]
        %573 = vst.msk [vmem:[%s572] sm:$0xf] %vm547, %v570
        %574 = vrot.lane.b32.xlu0 %v512, 112
        %v575 = vpop.permute.xlu0 %574
        %s577 = scalar_lea.vmem %s431, 8 [#allocation11]
        %578 = vst.msk [vmem:[%s577] sm:$0xf] %vm547, %v575
        %579 = vrot.lane.b32.xlu0 %v546, 112
        %v580 = vpop.permute.xlu0 %579
        %s582 = scalar_lea.vmem %s438, 8 [#allocation13]
        %583 = vst.msk [vmem:[%s582] sm:$0xf] %vm547, %v580
        %584 = vrot.lane.b32.xlu0 %v478, 104
        %v585 = vpop.permute.xlu0 %584
        %s587 = scalar_lea.vmem %s424, 12 [#allocation10]
        %588 = vst.msk [vmem:[%s587] sm:$0xf] %vm547, %v585
        %589 = vrot.lane.b32.xlu0 %v512, 104
        %v590 = vpop.permute.xlu0 %589
        %s592 = scalar_lea.vmem %s431, 12 [#allocation11]
        %593 = vst.msk [vmem:[%s592] sm:$0xf] %vm547, %v590
        %594 = vrot.lane.b32.xlu0 %v546, 104
        %v595 = vpop.permute.xlu0 %594
        %s597 = scalar_lea.vmem %s438, 12 [#allocation13]
        %598 = vst.msk [vmem:[%s597] sm:$0xf] %vm547, %v595
        %s599 = sand.u32 %s208, 1
        %s600 = scalar_lea.sflag [#allocation4], %s599
        %s601 = sand.u32 %s208, 1
        %s602 = smul.addr %s601, 16
        %s603 = scalar_lea.vmem [#allocation10], %s602
        %s604 = sand.u32 %s32, 1
        %s605 = scalar_lea.sflag [#allocation12], %s604
        %s606 = sand.u32 %s236, 1
        %s607 = smul.addr %s606, 16
        %s608 = scalar_lea.vmem [#allocation11], %s607
        %s609 = sand.u32 %s32, 1
        %s610 = scalar_lea.sflag [#allocation12], %s609
        %s611 = sand.u32 %s264, 1
        %s612 = smul.addr %s611, 16
        %s613 = scalar_lea.vmem [#allocation13], %s612
        // Predicated region
        $region65: #{tpu_custom_call.1} parent=47 // pred_check
          %p614 = pneg %p218
        $region66: #{tpu_custom_call.1} parent=47 // pred_check_branch
          %616 = sbr.rel (%p614) target = $region68
        $region67: #{tpu_custom_call.1} parent=47 // pred_region
          %618 = vsyncadd %s600, 0
          %s619 = smul.addr %s36, 4
          %s620 = sadd.s32 %s37, %s619
          %s621 = smul.addr %s620, 4
          %s622 = scalar_lea.hbm %s7, %s621
          %s623 = sshll.u32 %s603, 4
          %s624 = int_to_ptr.vmem [resolvable:$true] %s623
          %s625 = sshll.u32 %s622, 4
          %s626 = int_to_ptr.hbm [resolvable:$true] %s625
          %631 = dma.vmem_to_hbm [thread:$0]  %s624, 256, %s626, %s600, 64, 64, 4
        $region68: #{tpu_custom_call.1} parent=47 // pred_fallthru
          _
        // Predicated region
        $region69: #{tpu_custom_call.1} parent=47 // pred_check
          %p632 = pneg %p246
        $region70: #{tpu_custom_call.1} parent=47 // pred_check_branch
          %634 = sbr.rel (%p632) target = $region72
        $region71: #{tpu_custom_call.1} parent=47 // pred_region
          %636 = vsyncadd %s605, 0
          %s637 = smul.addr %s36, 4
          %s638 = sadd.s32 %s37, %s637
          %s639 = smul.addr %s638, 4
          %s640 = scalar_lea.hbm %s8, %s639
          %s641 = sshll.u32 %s608, 4
          %s642 = int_to_ptr.vmem [resolvable:$true] %s641
          %s643 = sshll.u32 %s640, 4
          %s644 = int_to_ptr.hbm [resolvable:$true] %s643
          %649 = dma.vmem_to_hbm [thread:$0]  %s642, 256, %s644, %s605, 64, 64, 4
        $region72: #{tpu_custom_call.1} parent=47 // pred_fallthru
          _
        // Predicated region
        $region73: #{tpu_custom_call.1} parent=47 // pred_check
          %p650 = pneg %p274
        $region74: #{tpu_custom_call.1} parent=47 // pred_check_branch
          %652 = sbr.rel (%p650) target = $region76
        $region75: #{tpu_custom_call.1} parent=47 // pred_region
          %654 = vsyncadd %s610, 0
          %s655 = smul.addr %s36, 4
          %s656 = sadd.s32 %s37, %s655
          %s657 = smul.addr %s656, 4
          %s658 = scalar_lea.hbm %s9, %s657
          %s659 = sshll.u32 %s613, 4
          %s660 = int_to_ptr.vmem [resolvable:$true] %s659
          %s661 = sshll.u32 %s658, 4
          %s662 = int_to_ptr.hbm [resolvable:$true] %s661
          %667 = dma.vmem_to_hbm [thread:$0]  %s660, 256, %s662, %s610, 64, 64, 4
        $region76: #{tpu_custom_call.1} parent=47 // pred_fallthru
          _
      $region48: #{tpu_custom_call.1} parent=5 // pred_fallthru
        _
      %p668 = scmp.le.s32.totalorder 2, %s27
      // Predicated region
      $region77: #{tpu_custom_call.1} parent=5 // pred_check
        %p669 = pneg %p668
      $region78: #{tpu_custom_call.1} parent=5 // pred_check_branch
        %671 = sbr.rel (%p669) target = $region80
      $region79: #{tpu_custom_call.1} parent=5 // pred_region
        %s672 = ssub.s32 %s27, 2
        // Predicated region
        $region81: #{tpu_custom_call.1} parent=79 // pred_check
          %p673 = pneg %p224
        $region82: #{tpu_custom_call.1} parent=79 // pred_check_branch
          %675 = sbr.rel (%p673) target = $region84
        $region83: #{tpu_custom_call.1} parent=79 // pred_region
          %s676 = sand.u32 %s209, 1
          %s677 = scalar_lea.sflag [#allocation4], %s676
          %s678 = sand.u32 %s209, 1
          %s679 = smul.addr %s678, 16
          %s680 = scalar_lea.vmem [#allocation10], %s679
          %682 = dma.done %s677, 256
        $region84: #{tpu_custom_call.1} parent=79 // pred_fallthru
          _
        // Predicated region
        $region85: #{tpu_custom_call.1} parent=79 // pred_check
          %p683 = pneg %p252
        $region86: #{tpu_custom_call.1} parent=79 // pred_check_branch
          %685 = sbr.rel (%p683) target = $region88
        $region87: #{tpu_custom_call.1} parent=79 // pred_region
          %s686 = sand.u32 %s33, 1
          %s687 = scalar_lea.sflag [#allocation12], %s686
          %s688 = sand.u32 %s237, 1
          %s689 = smul.addr %s688, 16
          %s690 = scalar_lea.vmem [#allocation11], %s689
          %692 = dma.done %s687, 256
        $region88: #{tpu_custom_call.1} parent=79 // pred_fallthru
          _
        // Predicated region
        $region89: #{tpu_custom_call.1} parent=79 // pred_check
          %p693 = pneg %p280
        $region90: #{tpu_custom_call.1} parent=79 // pred_check_branch
          %695 = sbr.rel (%p693) target = $region92
        $region91: #{tpu_custom_call.1} parent=79 // pred_region
          %s696 = sand.u32 %s33, 1
          %s697 = scalar_lea.sflag [#allocation12], %s696
          %s698 = sand.u32 %s265, 1
          %s699 = smul.addr %s698, 16
          %s700 = scalar_lea.vmem [#allocation13], %s699
          %702 = dma.done %s697, 256
        $region92: #{tpu_custom_call.1} parent=79 // pred_fallthru
          _
      $region80: #{tpu_custom_call.1} parent=5 // pred_fallthru
        _
    $region6: #{tpu_custom_call.1} parent=1 // loop_footer
      %s31 = sadd.s32 1, %s27
    $region7: #{tpu_custom_call.1} parent=1 // loop_footer_branch
      %26 = sbr.rel target = $region3
    $region8: #{tpu_custom_call.1} parent=1 // loop_exit
      _
    %703 = vsyncpa [#allocation3], 1
    %s704 = scalar_lea.sflag [#allocation3], 1
    %705 = vsyncpa %s704, 1
    %706 = vsyncpa [#allocation6], 1
    %707 = vsyncpa [#allocation9], 1
    %708 = vsyncpa [#allocation4], 1
    %s709 = scalar_lea.sflag [#allocation4], 1
    %710 = vsyncpa %s709, 1
    %711 = vsyncpa [#allocation12], 1
    %s712 = scalar_lea.sflag [#allocation12], 1
    %713 = vsyncpa %s712, 1

</llo_original>
